<compile_context>
chip_gen: v6e
topology: v6e:2x2x1
jax: 0.10.0
libtpu: 0.0.40
codegen_flags: <defaults>
</compile_context>

<pallas_src>
import functools
import math

import jax
import jax.numpy as jnp
from jax import lax
from jax.experimental import pallas as pl
from jax.experimental.pallas import tpu as pltpu


def _round_up(x, m):
    return (x + m - 1) // m * m


def _cdiv(a, b):
    return -(-a // b)


def _gelu_exact(x):
    # PyTorch nn.GELU default (exact erf form), as used by the timm ViT MLP. Computed in f32.
    return 0.5 * x * (1.0 + lax.erf(x * (1.0 / math.sqrt(2.0))))


# ----------------------------------------------------------------------------- kernel body
def _mlp_kernel(x_ref, w1_ref, b1_ref, w2_ref, b2_ref, o_ref, acc_ref):
    # Grid: (row_tiles, hidden_chunks).  x / out tiles are indexed by the row axis only,
    # w1/b1/w2 chunks by the hidden axis only; acc_ref is an f32 VMEM accumulator that
    # persists across the hidden (reduction) axis.
    k = pl.program_id(1)

    @pl.when(k == 0)
    def _():
        acc_ref[...] = jnp.zeros_like(acc_ref)

    # Native-dtype MXU operands, f32 accumulation.
    h = jnp.dot(x_ref[...], w1_ref[...], preferred_element_type=jnp.float32)
    h = _gelu_exact(h + b1_ref[...].astype(jnp.float32))      # f32 activation (chunk only)
    h = h.astype(w2_ref.dtype)                                # native dtype for 2nd MXU pass
    acc_ref[...] += jnp.dot(h, w2_ref[...], preferred_element_type=jnp.float32)

    @pl.when(k == pl.num_programs(1) - 1)
    def _():
        # Dropout(p=0.0) is the identity.
        o_ref[...] = (acc_ref[...] + b2_ref[...].astype(jnp.float32)).astype(o_ref.dtype)


# ------------------------------------------------------------------------- sizing helpers
def _pick_row_tile(m, itemsize, tm_target):
    """Row tile: sublane-aligned (8 f32 / 16 bf16), near tm_target, minimal padded rows."""
    sub = 16 if itemsize < 4 else 8
    tm_target = max(sub, _round_up(tm_target, sub))
    n_tiles = max(1, _cdiv(m, tm_target))
    tm = _round_up(_cdiv(m, n_tiles), sub)
    return tm, n_tiles * tm  # (tile rows, padded m)


def _pick_hidden_chunk(hid_p, target):
    """Largest 128-multiple <= target that divides the (128-padded) hidden dim."""
    target = max(128, _round_up(target, 128))
    hk = min(hid_p, target)
    while hid_p % hk:
        hk -= 128
    return hk


@functools.lru_cache(maxsize=None)
def _vmem_cap_bytes():
    try:
        info = pltpu.get_tpu_info()
        cap = int(getattr(info, "vmem_capacity_bytes", 0)) or (64 << 20)
    except Exception:
        cap = 64 << 20
    # Leave headroom for Mosaic internal scratch / semaphores (matters on v7x's 64 MiB/TC);
    # on v5e/v6e (128 MiB) this lands well above the default scoped limit.
    return max(48 << 20, cap - (12 << 20))


def _vmem_budget(tm, d_in_p, hid_p, d_out_p, hk, isz):
    need = (2 * tm * d_in_p * isz            # x tiles (double-buffered)
            + 2 * (d_in_p * hk + hk) * isz   # w1 / b1 chunks (double-buffered)
            + 2 * hk * d_out_p * isz         # w2 chunks (double-buffered)
            + 2 * d_out_p * isz              # b2
            + 2 * tm * d_out_p * isz         # out tiles (double-buffered)
            + tm * d_out_p * 4               # f32 accumulator scratch
            + 2 * tm * hk * 4)               # f32 hidden-chunk intermediates
    return int(min(max(2 * need, 32 << 20), _vmem_cap_bytes()))


# ----------------------------------------------------------------------- pallas_call cache
@functools.lru_cache(maxsize=None)
def _build_mlp_call(m_p, d_in_p, hid_p, d_out_p, tm, hk, dtype_name, vmem_limit):
    dtype = jnp.dtype(dtype_name)
    grid = (m_p // tm, hid_p // hk)

    in_specs = [
        pl.BlockSpec((tm, d_in_p), lambda i, k: (i, 0)),   # x tile (resident across k)
        pl.BlockSpec((d_in_p, hk), lambda i, k: (0, k)),   # w1 chunk (streamed over k)
        pl.BlockSpec((1, hk), lambda i, k: (0, k)),        # b1 chunk
        pl.BlockSpec((hk, d_out_p), lambda i, k: (k, 0)),  # w2 chunk (streamed over k)
        pl.BlockSpec((1, d_out_p), lambda i, k: (0, 0)),   # b2 (resident)
    ]
    out_specs = pl.BlockSpec((tm, d_out_p), lambda i, k: (i, 0))  # resident across k

    isz = dtype.itemsize
    cost = pl.CostEstimate(
        flops=2 * m_p * (d_in_p * hid_p + hid_p * d_out_p),
        transcendentals=m_p * hid_p,  # erf on hidden activations
        bytes_accessed=isz * (m_p * (d_in_p + d_out_p)
                              + d_in_p * hid_p + hid_p * d_out_p + hid_p + d_out_p),
    )

    return pl.pallas_call(
        _mlp_kernel,
        out_shape=jax.ShapeDtypeStruct((m_p, d_out_p), dtype),
        grid_spec=pltpu.PrefetchScalarGridSpec(
            num_scalar_prefetch=0,
            grid=grid,
            in_specs=in_specs,
            out_specs=out_specs,
            scratch_shapes=[pltpu.VMEM((tm, d_out_p), jnp.float32)],
        ),
        compiler_params=pltpu.CompilerParams(
            dimension_semantics=("parallel", "arbitrary"),  # rows // cores, hidden = reduction
            vmem_limit_bytes=int(vmem_limit),
        ),
        cost_estimate=cost,
    )


# ----------------------------------------------------------------------------- public API
@functools.partial(jax.jit, static_argnames=("tm_target", "hk_target"))
def mlp_pallas(x, w1, b1, w2, b2, *, tm_target=256, hk_target=512):
    """x: (..., d_in) -> (..., d_out).  fc1 -> exact GELU -> fc2 (dropout p=0 == identity)."""
    lead = x.shape[:-1]
    d_in = x.shape[-1]
    hidden = w1.shape[1]
    d_out = w2.shape[1]
    dtype = x.dtype
    isz = jnp.dtype(dtype).itemsize

    x2d = x.reshape(-1, d_in)
    m = x2d.shape[0]

    tm, m_p = _pick_row_tile(m, isz, tm_target)
    d_in_p = _round_up(d_in, 128)
    hid_p = _round_up(hidden, 128)
    d_out_p = _round_up(d_out, 128)
    hk = _pick_hidden_chunk(hid_p, hk_target)

    # Conditional zero-pads (no-ops for real ViT shapes; exact for Linear + erf-GELU).
    if (m_p, d_in_p) != (m, d_in):
        x2d = jnp.pad(x2d, ((0, m_p - m), (0, d_in_p - d_in)))
    if (d_in_p, hid_p) != (d_in, hidden):
        w1 = jnp.pad(w1, ((0, d_in_p - d_in), (0, hid_p - hidden)))
    b1 = b1.reshape(1, hidden)
    if hid_p != hidden:
        b1 = jnp.pad(b1, ((0, 0), (0, hid_p - hidden)))
    if (hid_p, d_out_p) != (hidden, d_out):
        w2 = jnp.pad(w2, ((0, hid_p - hidden), (0, d_out_p - d_out)))
    b2 = b2.reshape(1, d_out)
    if d_out_p != d_out:
        b2 = jnp.pad(b2, ((0, 0), (0, d_out_p - d_out)))

    vmem_limit = _vmem_budget(tm, d_in_p, hid_p, d_out_p, hk, isz)
    call = _build_mlp_call(m_p, d_in_p, hid_p, d_out_p, tm, hk,
                           jnp.dtype(dtype).name, vmem_limit)
    out = call(x2d, w1, b1, w2, b2)
    return out[:m, :d_out].reshape(*lead, d_out)


def mlp_reference(x, w1, b1, w2, b2):
    """Pure-JAX reference with identical numerics (native-dtype dots, f32 accumulation)."""
    x2d = x.reshape(-1, x.shape[-1])
    h = jnp.dot(x2d, w1, preferred_element_type=jnp.float32) + b1.reshape(1, -1).astype(jnp.float32)
    h = _gelu_exact(h).astype(w2.dtype)
    y = jnp.dot(h, w2, preferred_element_type=jnp.float32) + b2.reshape(1, -1).astype(jnp.float32)
    return y.astype(x.dtype).reshape(*x.shape[:-1], w2.shape[1])


def init_linear_params(key, fan_in, fan_out, dtype=jnp.float32):
    # Mirror torch.nn.Linear default init: U(-1/sqrt(fan_in), 1/sqrt(fan_in)).
    kw, kb = jax.random.split(key)
    bound = 1.0 / math.sqrt(fan_in)
    # Stored as (fan_in, fan_out) so the kernel computes x @ W (== x @ W_torch.T).
    w = jax.random.uniform(kw, (fan_in, fan_out), dtype, -bound, bound)
    b = jax.random.uniform(kb, (fan_out,), dtype, -bound, bound)
    return w, b


if __name__ == "__main__":
    key = jax.random.PRNGKey(0)
    k_x, k_fc1, k_fc2 = jax.random.split(key, 3)

    # Small ViT-block-MLP-like shapes: 197 tokens per image, d -> 4d -> d MLP with d = 256.
    batch, seq = 2, 197
    d_in, hidden, d_out = 256, 1024, 256

    x = jax.random.normal(k_x, (batch, seq, d_in), dtype=jnp.float32)
    w1, b1 = init_linear_params(k_fc1, d_in, hidden)
    w2, b2 = init_linear_params(k_fc2, hidden, d_out)

    # f32 path (matches the PyTorch module's default dtype).
    y = jax.block_until_ready(mlp_pallas(x, w1, b1, w2, b2))
    ref = mlp_reference(x, w1, b1, w2, b2)
    assert y.shape == (batch, seq, d_out)
    err = float(jnp.max(jnp.abs(y - ref)))
    assert jnp.allclose(y, ref, atol=2e-3, rtol=2e-3), err

    # bf16 path: native-dtype MXU operands with f32 accumulation (no up-casting in-kernel).
    xb = x.astype(jnp.bfloat16)
    w1b, b1b = w1.astype(jnp.bfloat16), b1.astype(jnp.bfloat16)
    w2b, b2b = w2.astype(jnp.bfloat16), b2.astype(jnp.bfloat16)
    yb = jax.block_until_ready(mlp_pallas(xb, w1b, b1b, w2b, b2b))
    refb = mlp_reference(xb, w1b, b1b, w2b, b2b)
    assert yb.shape == (batch, seq, d_out)
    errb = float(jnp.max(jnp.abs(yb.astype(jnp.float32) - refb.astype(jnp.float32))))
    assert jnp.allclose(yb.astype(jnp.float32), refb.astype(jnp.float32),
                        atol=5e-2, rtol=5e-2), errb

    print("KERNEL_OK")
</pallas_src>

<mosaic_0001>
module attributes {stable_mosaic.version = 11 : i64} {
  func.func @_mlp_kernel(%arg0: i32, %arg1: i32, %arg2: memref<200x256xf32, #tpu.memory_space<vmem>>, %arg3: memref<256x512xf32, #tpu.memory_space<vmem>>, %arg4: memref<1x512xf32, #tpu.memory_space<vmem>>, %arg5: memref<512x256xf32, #tpu.memory_space<vmem>>, %arg6: memref<1x256xf32, #tpu.memory_space<vmem>>, %arg7: memref<200x256xf32, #tpu.memory_space<vmem>>, %arg8: memref<200x256xf32, #tpu.memory_space<vmem>>) attributes {dimension_semantics = [#tpu.dimension_semantics<parallel>, #tpu.dimension_semantics<arbitrary>], iteration_bounds = array<i64: 2, 2>, scalar_prefetch = 0 : i64, scratch_operands = 1 : i64, tpu.core_type = #tpu.core_type<tc>, window_params = [{transform_indices = @transform_0, window_bounds = array<i64: 200, 256>}, {transform_indices = @transform_1, window_bounds = array<i64: 256, 512>}, {transform_indices = @transform_2, window_bounds = array<i64: 1, 512>}, {transform_indices = @transform_3, window_bounds = array<i64: 512, 256>}, {pipeline_mode = #tpu.pipeline_mode<synchronous>, transform_indices = @transform_4, window_bounds = array<i64: 1, 256>}, {transform_indices = @transform_5, window_bounds = array<i64: 200, 256>}]} {
    %c0_i32 = arith.constant 0 : i32
    %0 = arith.cmpi eq, %arg1, %c0_i32 : i32
    %1 = arith.extui %0 : i1 to i32
    %c0_i32_0 = arith.constant 0 : i32
    %2 = arith.cmpi ne, %1, %c0_i32_0 : i32
    scf.if %2 {
      %cst_17 = arith.constant 0.000000e+00 : f32
      %25 = vector.broadcast %cst_17 : f32 to vector<200x256xf32>
      %c0_18 = arith.constant 0 : index
      %c0_19 = arith.constant 0 : index
      %26 = vector.load %arg8[%c0_18, %c0_19] : memref<200x256xf32, #tpu.memory_space<vmem>>, vector<200x256xf32>
      tpu.vector_store %arg8[%c0_18, %c0_19], %25 {strides = array<i32>} : memref<200x256xf32, #tpu.memory_space<vmem>>, vector<200x256xf32>,
    } else {
    }
    %c0 = arith.constant 0 : index
    %c0_1 = arith.constant 0 : index
    %3 = vector.load %arg2[%c0, %c0_1] : memref<200x256xf32, #tpu.memory_space<vmem>>, vector<200x256xf32>
    %c0_2 = arith.constant 0 : index
    %c0_3 = arith.constant 0 : index
    %4 = vector.load %arg3[%c0_2, %c0_3] : memref<256x512xf32, #tpu.memory_space<vmem>>, vector<256x512xf32>
    %cst = arith.constant dense<0.000000e+00> : vector<200x512xf32>
    %5 = tpu.matmul %3, %4, %cst {dimension_numbers = #tpu.dot_dimension_numbers<[1], [0], [0], [1], [0, 0, 1, 1], [], []>} : vector<200x256xf32>, vector<256x512xf32>, vector<200x512xf32> -> vector<200x512xf32>
    %c0_4 = arith.constant 0 : index
    %c0_5 = arith.constant 0 : index
    %6 = vector.load %arg4[%c0_4, %c0_5] : memref<1x512xf32, #tpu.memory_space<vmem>>, vector<1x512xf32>
    %7 = vector.broadcast %6 : vector<1x512xf32> to vector<200x512xf32>
    %8 = arith.addf %5, %7 : vector<200x512xf32>
    %cst_6 = arith.constant 5.000000e-01 : f32
    %9 = vector.broadcast %cst_6 : f32 to vector<200x512xf32>
    %10 = arith.mulf %9, %8 : vector<200x512xf32>
    %cst_7 = arith.constant 0.707106769 : f32
    %11 = vector.broadcast %cst_7 : f32 to vector<200x512xf32>
    %12 = arith.mulf %8, %11 : vector<200x512xf32>
    %13 = math.erf %12 : vector<200x512xf32>
    %cst_8 = arith.constant 1.000000e+00 : f32
    %14 = vector.broadcast %cst_8 : f32 to vector<200x512xf32>
    %15 = arith.addf %14, %13 : vector<200x512xf32>
    %16 = arith.mulf %10, %15 : vector<200x512xf32>
    %c0_9 = arith.constant 0 : index
    %c0_10 = arith.constant 0 : index
    %17 = vector.load %arg8[%c0_9, %c0_10] : memref<200x256xf32, #tpu.memory_space<vmem>>, vector<200x256xf32>
    %c0_11 = arith.constant 0 : index
    %c0_12 = arith.constant 0 : index
    %18 = vector.load %arg5[%c0_11, %c0_12] : memref<512x256xf32, #tpu.memory_space<vmem>>, vector<512x256xf32>
    %cst_13 = arith.constant dense<0.000000e+00> : vector<200x256xf32>
    %19 = tpu.matmul %16, %18, %cst_13 {dimension_numbers = #tpu.dot_dimension_numbers<[1], [0], [0], [1], [0, 0, 1, 1], [], []>} : vector<200x512xf32>, vector<512x256xf32>, vector<200x256xf32> -> vector<200x256xf32>
    %20 = arith.addf %17, %19 : vector<200x256xf32>
    %c0_14 = arith.constant 0 : index
    %c0_15 = arith.constant 0 : index
    %21 = vector.load %arg8[%c0_14, %c0_15] : memref<200x256xf32, #tpu.memory_space<vmem>>, vector<200x256xf32>
    tpu.vector_store %arg8[%c0_14, %c0_15], %20 {strides = array<i32>} : memref<200x256xf32, #tpu.memory_space<vmem>>, vector<200x256xf32>,
    %c1_i32 = arith.constant 1 : i32
    %22 = arith.cmpi eq, %arg1, %c1_i32 : i32
    %23 = arith.extui %22 : i1 to i32
    %c0_i32_16 = arith.constant 0 : i32
    %24 = arith.cmpi ne, %23, %c0_i32_16 : i32
    scf.if %24 {
      %c0_17 = arith.constant 0 : index
      %c0_18 = arith.constant 0 : index
      %25 = vector.load %arg8[%c0_17, %c0_18] : memref<200x256xf32, #tpu.memory_space<vmem>>, vector<200x256xf32>
      %c0_19 = arith.constant 0 : index
      %c0_20 = arith.constant 0 : index
      %26 = vector.load %arg6[%c0_19, %c0_20] : memref<1x256xf32, #tpu.memory_space<vmem>>, vector<1x256xf32>
      %27 = vector.broadcast %26 : vector<1x256xf32> to vector<200x256xf32>
      %28 = arith.addf %25, %27 : vector<200x256xf32>
      %c0_21 = arith.constant 0 : index
      %c0_22 = arith.constant 0 : index
      %29 = vector.load %arg7[%c0_21, %c0_22] : memref<200x256xf32, #tpu.memory_space<vmem>>, vector<200x256xf32>
      tpu.vector_store %arg7[%c0_21, %c0_22], %28 {strides = array<i32>} : memref<200x256xf32, #tpu.memory_space<vmem>>, vector<200x256xf32>,
    } else {
    }
    return
  }
  func.func @transform_0(%arg0: i32, %arg1: i32) -> (i32, i32) {
    %c0_i32 = arith.constant 0 : i32
    %c0_i32_0 = arith.constant 0 : i32
    return %arg0, %c0_i32 : i32, i32
  }
  func.func @transform_1(%arg0: i32, %arg1: i32) -> (i32, i32) {
    %c0_i32 = arith.constant 0 : i32
    %c0_i32_0 = arith.constant 0 : i32
    return %c0_i32, %arg1 : i32, i32
  }
  func.func @transform_2(%arg0: i32, %arg1: i32) -> (i32, i32) {
    %c0_i32 = arith.constant 0 : i32
    %c0_i32_0 = arith.constant 0 : i32
    return %c0_i32, %arg1 : i32, i32
  }
  func.func @transform_3(%arg0: i32, %arg1: i32) -> (i32, i32) {
    %c0_i32 = arith.constant 0 : i32
    %c0_i32_0 = arith.constant 0 : i32
    return %arg1, %c0_i32 : i32, i32
  }
  func.func @transform_4(%arg0: i32, %arg1: i32) -> (i32, i32) {
    %c0_i32 = arith.constant 0 : i32
    %c0_i32_0 = arith.constant 0 : i32
    %c0_i32_1 = arith.constant 0 : i32
    return %c0_i32, %c0_i32_0 : i32, i32
  }
  func.func @transform_5(%arg0: i32, %arg1: i32) -> (i32, i32) {
    %c0_i32 = arith.constant 0 : i32
    %c0_i32_0 = arith.constant 0 : i32
    return %arg0, %c0_i32 : i32, i32
  }
}

</mosaic_0001>

<llo_original>
// kernel: mlp_pallas.1
$region0: #{mlp_pallas.1}
  #allocation0 [shape = 'u32[]', space=smem, size = 0x4, offset = 0x4, fixed_abs, tag = 'smem constant byte address 0x4 - core index']
  #allocation1 [shape = 'u32[144,128]{1,0:T(1,128)}', space=vmem, size = 0x12000, scoped, tag = 'internal scratch']
  #allocation2 [shape = 'f32[200,256]{1,0:T(8,128)}', space=vmem, size = 0x32000, scoped, tag = 'scratch operand']
  %s0 = inlined_call_operand.vmem [shape: f32[400,256], index: 0, kind: input, shape index: {}]
  %s1 = inlined_call_operand.vmem [shape: f32[256,1024], index: 1, kind: input, shape index: {}]
  %s2 = inlined_call_operand.vmem [shape: f32[1,1024], index: 2, kind: input, shape index: {}]
  %s3 = inlined_call_operand.vmem [shape: f32[1024,256], index: 3, kind: input, shape index: {}]
  %s4 = inlined_call_operand.vmem [shape: f32[1,256], index: 4, kind: input, shape index: {}]
  %s5 = inlined_call_operand.vmem [shape: f32[400,256], index: 5, kind: output, shape index: {}]
  %s6 = sld [smem:[#allocation0]]
  $region84: #{mlp_pallas.1} parent=0
    _
  %s8 = ssub.s32 1, %s6
  %s9 = scalar_select 0, %s8, %s6
  $region1: #{mlp_pallas.1} parent=0
    #allocation3 [shape = 'u8[1048576]{0}', space=vmem, size = 0x100000, scoped, tag = 'input window, operand 1']
    loop: start=0, step=1, limit=6
    $region2: #{mlp_pallas.1} parent=1 // loop_pre_header
      _
    $region3: #{mlp_pallas.1} parent=1 // loop_header
      %s11 = sphi 0, %s15
      %p12 = scmp.ge.s32.totalorder %s11, 6
      %s18 = sphi 0, %s30
      %s19 = sphi 0, %s26
      %s20 = sphi 0, %s18
      %s21 = sphi 0, %s19
      %s22 = sphi 0, %s20
      %s23 = sphi 0, %s21
      %s33 = sphi 0, %s35
      %s36 = sphi 0, %s33
      %s37 = sphi 0, %s36
      %s53 = sphi 0, %s37
      %s59 = sphi 0, %s61
      %s62 = sphi 0, %s59
      %s63 = sphi 0, %s62
      %s79 = sphi 0, %s63
      %s85 = sphi 0, %s87
      %s88 = sphi 0, %s85
      %s89 = sphi 0, %s88
      %s105 = sphi 0, %s89
      %s111 = sphi 0, %s113
      %s114 = sphi 0, %s111
      %s115 = sphi 0, %s114
      %s131 = sphi 0, %s115
      %s135 = sphi 0, %s135
      %s137 = sphi 0, %s135
      %s138 = sphi 0, %s137
      %s152 = sphi 0, %s138
      %s158 = sphi 0, %s160
      %s161 = sphi 0, %s158
      %s162 = sphi 0, %s161
      %s178 = sphi 0, %s162
    $region4: #{mlp_pallas.1} parent=1 // loop_header_branch
      %14 = sbr.rel (%p12) target = $region8
    $region5: #{mlp_pallas.1} parent=1 // loop_body
      %s16 = ssub.s32 %s11, 1
      %s17 = ssub.s32 %s11, 2
      %s24 = sadd.s32 1, %s19
      %p25 = scmp.ge.s32.totalorder %s24, 2
      %s26 = scalar_select %p25, 0, %s24
      %s27 = sadd.s32 1, %s18
      %s28 = scalar_select %p25, %s27, %s18
      %p29 = scmp.ge.s32.totalorder %s28, 2
      %s30 = scalar_select %p29, 0, %s28
      %s31 = ssub.s32 %s18, %s30
      %p32 = scmp.eq.s32.totalorder %s31, 0
      %s34 = sadd.s32 %s33, 1
      %s35 = scalar_select %p32, %s33, %s34
      %p38 = pneg %p32
      %p39 = scmp.eq.s32.totalorder %s11, 3
      %p40 = por %p38, %p39
      %p41 = scmp.ne.s32.totalorder %s33, %s36
      %p42 = scmp.eq.s32.totalorder %s11, 0
      %p43 = por %p41, %p42
      %p44 = scmp.ne.s32.totalorder %s33, %s36
      %p45 = scmp.eq.s32.totalorder %s16, 3
      %p46 = por %p44, %p45
      %p47 = scmp.ne.s32.totalorder %s36, %s37
      %p48 = scmp.eq.s32.totalorder %s16, 0
      %p49 = por %p47, %p48
      %p50 = scmp.ne.s32.totalorder %s36, %s37
      %p51 = scmp.eq.s32.totalorder %s17, 3
      %p52 = por %p50, %p51
      %p54 = scmp.ne.s32.totalorder %s37, %s53
      %p55 = scmp.eq.s32.totalorder %s17, 0
      %p56 = por %p54, %p55
      %s57 = ssub.s32 %s19, %s26
      %p58 = scmp.eq.s32.totalorder %s57, 0
      %s60 = sadd.s32 %s59, 1
      %s61 = scalar_select %p58, %s59, %s60
      %p64 = pneg %p58
      %p65 = scmp.eq.s32.totalorder %s11, 3
      %p66 = por %p64, %p65
      %p67 = scmp.ne.s32.totalorder %s59, %s62
      %p68 = scmp.eq.s32.totalorder %s11, 0
      %p69 = por %p67, %p68
      %p70 = scmp.ne.s32.totalorder %s59, %s62
      %p71 = scmp.eq.s32.totalorder %s16, 3
      %p72 = por %p70, %p71
      %p73 = scmp.ne.s32.totalorder %s62, %s63
      %p74 = scmp.eq.s32.totalorder %s16, 0
      %p75 = por %p73, %p74
      %p76 = scmp.ne.s32.totalorder %s62, %s63
      %p77 = scmp.eq.s32.totalorder %s17, 3
      %p78 = por %p76, %p77
      %p80 = scmp.ne.s32.totalorder %s63, %s79
      %p81 = scmp.eq.s32.totalorder %s17, 0
      %p82 = por %p80, %p81
      %s83 = ssub.s32 %s19, %s26
      %p84 = scmp.eq.s32.totalorder %s83, 0
      %s86 = sadd.s32 %s85, 1
      %s87 = scalar_select %p84, %s85, %s86
      %p90 = pneg %p84
      %p91 = scmp.eq.s32.totalorder %s11, 3
      %p92 = por %p90, %p91
      %p93 = scmp.ne.s32.totalorder %s85, %s88
      %p94 = scmp.eq.s32.totalorder %s11, 0
      %p95 = por %p93, %p94
      %p96 = scmp.ne.s32.totalorder %s85, %s88
      %p97 = scmp.eq.s32.totalorder %s16, 3
      %p98 = por %p96, %p97
      %p99 = scmp.ne.s32.totalorder %s88, %s89
      %p100 = scmp.eq.s32.totalorder %s16, 0
      %p101 = por %p99, %p100
      %p102 = scmp.ne.s32.totalorder %s88, %s89
      %p103 = scmp.eq.s32.totalorder %s17, 3
      %p104 = por %p102, %p103
      %p106 = scmp.ne.s32.totalorder %s89, %s105
      %p107 = scmp.eq.s32.totalorder %s17, 0
      %p108 = por %p106, %p107
      %s109 = ssub.s32 %s19, %s26
      %p110 = scmp.eq.s32.totalorder %s109, 0
      %s112 = sadd.s32 %s111, 1
      %s113 = scalar_select %p110, %s111, %s112
      %p116 = pneg %p110
      %p117 = scmp.eq.s32.totalorder %s11, 3
      %p118 = por %p116, %p117
      %p119 = scmp.ne.s32.totalorder %s111, %s114
      %p120 = scmp.eq.s32.totalorder %s11, 0
      %p121 = por %p119, %p120
      %p122 = scmp.ne.s32.totalorder %s111, %s114
      %p123 = scmp.eq.s32.totalorder %s16, 3
      %p124 = por %p122, %p123
      %p125 = scmp.ne.s32.totalorder %s114, %s115
      %p126 = scmp.eq.s32.totalorder %s16, 0
      %p127 = por %p125, %p126
      %p128 = scmp.ne.s32.totalorder %s114, %s115
      %p129 = scmp.eq.s32.totalorder %s17, 3
      %p130 = por %p128, %p129
      %p132 = scmp.ne.s32.totalorder %s115, %s131
      %p133 = scmp.eq.s32.totalorder %s17, 0
      %p134 = por %p132, %p133
      %s136 = sadd.s32 %s135, 1
      %p139 = scmp.eq.s32.totalorder %s11, 3
      %p140 = scmp.ne.s32.totalorder %s135, %s137
      %p141 = scmp.eq.s32.totalorder %s11, 0
      %p142 = por %p140, %p141
      %p143 = scmp.ne.s32.totalorder %s135, %s137
      %p144 = scmp.eq.s32.totalorder %s16, 3
      %p145 = por %p143, %p144
      %p146 = scmp.ne.s32.totalorder %s137, %s138
      %p147 = scmp.eq.s32.totalorder %s16, 0
      %p148 = por %p146, %p147
      %p149 = scmp.ne.s32.totalorder %s137, %s138
      %p150 = scmp.eq.s32.totalorder %s17, 3
      %p151 = por %p149, %p150
      %p153 = scmp.ne.s32.totalorder %s138, %s152
      %p154 = scmp.eq.s32.totalorder %s17, 0
      %p155 = por %p153, %p154
      %s156 = ssub.s32 %s18, %s30
      %p157 = scmp.eq.s32.totalorder %s156, 0
      %s159 = sadd.s32 %s158, 1
      %s160 = scalar_select %p157, %s158, %s159
      %p163 = pneg %p157
      %p164 = scmp.eq.s32.totalorder %s11, 3
      %p165 = por %p163, %p164
      %p166 = scmp.ne.s32.totalorder %s158, %s161
      %p167 = scmp.eq.s32.totalorder %s11, 0
      %p168 = por %p166, %p167
      %p169 = scmp.ne.s32.totalorder %s158, %s161
      %p170 = scmp.eq.s32.totalorder %s16, 3
      %p171 = por %p169, %p170
      %p172 = scmp.ne.s32.totalorder %s161, %s162
      %p173 = scmp.eq.s32.totalorder %s16, 0
      %p174 = por %p172, %p173
      %p175 = scmp.ne.s32.totalorder %s161, %s162
      %p176 = scmp.eq.s32.totalorder %s17, 3
      %p177 = por %p175, %p176
      %p179 = scmp.ne.s32.totalorder %s162, %s178
      %p180 = scmp.eq.s32.totalorder %s17, 0
      %p181 = por %p179, %p180
      %p182 = scmp.le.s32.totalorder 1, %s11
      %p183 = scmp.lt.s32.totalorder %s11, 5
      %p184 = pnand %p182, %p183
      %p185 = pneg %p184
      // Predicated region
      $region9: #{mlp_pallas.1} parent=5 // pred_check
        _
      $region10: #{mlp_pallas.1} parent=5 // pred_check_branch
        %187 = sbr.rel (%p184) target = $region12
      $region11: #{mlp_pallas.1} parent=5 // pred_region
        %s188 = ssub.s32 %s11, 1
        // Predicated region
        $region13: #{mlp_pallas.1} parent=11 // pred_check
          %p189 = pneg %p148
        $region14: #{mlp_pallas.1} parent=11 // pred_check_branch
          %191 = sbr.rel (%p189) target = $region16
        $region15: #{mlp_pallas.1} parent=11 // pred_region
          _
        $region16: #{mlp_pallas.1} parent=11 // pred_fallthru
          _
      $region12: #{mlp_pallas.1} parent=5 // pred_fallthru
        _
      %p192 = scmp.lt.s32.totalorder %s11, 4
      // Predicated region
      $region17: #{mlp_pallas.1} parent=5 // pred_check
        %p193 = pneg %p192
      $region18: #{mlp_pallas.1} parent=5 // pred_check_branch
        %195 = sbr.rel (%p193) target = $region20
      $region19: #{mlp_pallas.1} parent=5 // pred_region
        // Predicated region
        $region21: #{mlp_pallas.1} parent=19 // pred_check
          %p196 = pneg %p43
        $region22: #{mlp_pallas.1} parent=19 // pred_check_branch
          %198 = sbr.rel (%p196) target = $region24
        $region23: #{mlp_pallas.1} parent=19 // pred_region
          %s199 = smul.u32 25, %s18
          %p200 = scmp.lt.s32.totalorder %s199, 49
          %s201 = scalar_select %p200, %s199, 49
          %s202 = smul.addr %s201, 2
          %s203 = smul.addr %s202, 8
          %s204 = scalar_lea.vmem %s0, %s203
          %s205 = smul.u32 25, %s18
        $region24: #{mlp_pallas.1} parent=19 // pred_fallthru
          _
        // Predicated region
        $region25: #{mlp_pallas.1} parent=19 // pred_check
          %p206 = pneg %p69
        $region26: #{mlp_pallas.1} parent=19 // pred_check_branch
          %208 = sbr.rel (%p206) target = $region28
        $region27: #{mlp_pallas.1} parent=19 // pred_region
          %s209 = sand.u32 %s59, 1
          %s210 = sand.u32 %s59, 1
          %s211 = smul.addr %s210, 1024
          %s212 = scalar_lea.vmem [#allocation3], %s211
          %s213 = smul.u32 4, %s19
          %s214 = smul.addr %s213, 8
          %s215 = scalar_lea.vmem %s1, %s214
          // Predicated region
          $region29: #{mlp_pallas.1} parent=27 // pred_check
            _
          $region30: #{mlp_pallas.1} parent=27 // pred_check_branch
            %217 = sbr.rel (0) target = $region32
          $region31: #{mlp_pallas.1} parent=27 // pred_region
            // Predicated region
            $region33: #{mlp_pallas.1} parent=31 // pred_check
              _
            $region34: #{mlp_pallas.1} parent=31 // pred_check_branch
              %219 = sbr.rel (0) target = $region36
            $region35: #{mlp_pallas.1} parent=31 // pred_region
              loop: start=0, step=1, limit=1
              $region37: #{mlp_pallas.1} parent=35 // loop_pre_header
                _
              $region38: #{mlp_pallas.1} parent=35 // loop_header
                %s221 = sphi 0, %s225
                %p222 = scmp.ge.s32.totalorder %s221, 1
                %s226 = sphi %s215, %s215
                %s227 = sphi %s212, %s212
              $region39: #{mlp_pallas.1} parent=35 // loop_header_branch
                %224 = sbr.rel (%p222) target = $region43
              $region40: #{mlp_pallas.1} parent=35 // loop_body
                %v228 = vld [vmem:[%s226] sm:$0xff]
                %229 = vst [vmem:[%s227] sm:$0xff] %v228
                %v230 = vld [vmem:[%s226 + $0x8] sm:$0xff]
                %231 = vst [vmem:[%s227 + $0x8] sm:$0xff] %v230
                %v232 = vld [vmem:[%s226 + $0x10] sm:$0xff]
                %233 = vst [vmem:[%s227 + $0x10] sm:$0xff] %v232
                %v234 = vld [vmem:[%s226 + $0x18] sm:$0xff]
                %235 = vst [vmem:[%s227 + $0x18] sm:$0xff] %v234
                %v236 = vld [vmem:[%s226 + $0x40] sm:$0xff]
                %237 = vst [vmem:[%s227 + $0x20] sm:$0xff] %v236
                %v238 = vld [vmem:[%s226 + $0x48] sm:$0xff]
                %239 = vst [vmem:[%s227 + $0x28] sm:$0xff] %v238
                %v240 = vld [vmem:[%s226 + $0x50] sm:$0xff]
                %241 = vst [vmem:[%s227 + $0x30] sm:$0xff] %v240
                %v242 = vld [vmem:[%s226 + $0x58] sm:$0xff]
                %243 = vst [vmem:[%s227 + $0x38] sm:$0xff] %v242
                %v244 = vld [vmem:[%s226 + $0x80] sm:$0xff]
                %245 = vst [vmem:[%s227 + $0x40] sm:$0xff] %v244
                %v246 = vld [vmem:[%s226 + $0x88] sm:$0xff]
                %247 = vst [vmem:[%s227 + $0x48] sm:$0xff] %v246
                %v248 = vld [vmem:[%s226 + $0x90] sm:$0xff]
                %249 = vst [vmem:[%s227 + $0x50] sm:$0xff] %v248
                %v250 = vld [vmem:[%s226 + $0x98] sm:$0xff]
                %251 = vst [vmem:[%s227 + $0x58] sm:$0xff] %v250
                %v252 = vld [vmem:[%s226 + $0xc0] sm:$0xff]
                %253 = vst [vmem:[%s227 + $0x60] sm:$0xff] %v252
                %v254 = vld [vmem:[%s226 + $0xc8] sm:$0xff]
                %255 = vst [vmem:[%s227 + $0x68] sm:$0xff] %v254
                %v256 = vld [vmem:[%s226 + $0xd0] sm:$0xff]
                %257 = vst [vmem:[%s227 + $0x70] sm:$0xff] %v256
                %v258 = vld [vmem:[%s226 + $0xd8] sm:$0xff]
                %259 = vst [vmem:[%s227 + $0x78] sm:$0xff] %v258
                %v260 = vld [vmem:[%s226 + $0x100] sm:$0xff]
                %261 = vst [vmem:[%s227 + $0x80] sm:$0xff] %v260
                %v262 = vld [vmem:[%s226 + $0x108] sm:$0xff]
                %263 = vst [vmem:[%s227 + $0x88] sm:$0xff] %v262
                %v264 = vld [vmem:[%s226 + $0x110] sm:$0xff]
                %265 = vst [vmem:[%s227 + $0x90] sm:$0xff] %v264
                %v266 = vld [vmem:[%s226 + $0x118] sm:$0xff]
                %267 = vst [vmem:[%s227 + $0x98] sm:$0xff] %v266
                %v268 = vld [vmem:[%s226 + $0x140] sm:$0xff]
                %269 = vst [vmem:[%s227 + $0xa0] sm:$0xff] %v268
                %v270 = vld [vmem:[%s226 + $0x148] sm:$0xff]
                %271 = vst [vmem:[%s227 + $0xa8] sm:$0xff] %v270
                %v272 = vld [vmem:[%s226 + $0x150] sm:$0xff]
                %273 = vst [vmem:[%s227 + $0xb0] sm:$0xff] %v272
                %v274 = vld [vmem:[%s226 + $0x158] sm:$0xff]
                %275 = vst [vmem:[%s227 + $0xb8] sm:$0xff] %v274
                %v276 = vld [vmem:[%s226 + $0x180] sm:$0xff]
                %277 = vst [vmem:[%s227 + $0xc0] sm:$0xff] %v276
                %v278 = vld [vmem:[%s226 + $0x188] sm:$0xff]
                %279 = vst [vmem:[%s227 + $0xc8] sm:$0xff] %v278
                %v280 = vld [vmem:[%s226 + $0x190] sm:$0xff]
                %281 = vst [vmem:[%s227 + $0xd0] sm:$0xff] %v280
                %v282 = vld [vmem:[%s226 + $0x198] sm:$0xff]
                %283 = vst [vmem:[%s227 + $0xd8] sm:$0xff] %v282
                %v284 = vld [vmem:[%s226 + $0x1c0] sm:$0xff]
                %285 = vst [vmem:[%s227 + $0xe0] sm:$0xff] %v284
                %v286 = vld [vmem:[%s226 + $0x1c8] sm:$0xff]
                %287 = vst [vmem:[%s227 + $0xe8] sm:$0xff] %v286
                %v288 = vld [vmem:[%s226 + $0x1d0] sm:$0xff]
                %289 = vst [vmem:[%s227 + $0xf0] sm:$0xff] %v288
                %v290 = vld [vmem:[%s226 + $0x1d8] sm:$0xff]
                %291 = vst [vmem:[%s227 + $0xf8] sm:$0xff] %v290
                %v292 = vld [vmem:[%s226 + $0x200] sm:$0xff]
                %293 = vst [vmem:[%s227 + $0x100] sm:$0xff] %v292
                %v294 = vld [vmem:[%s226 + $0x208] sm:$0xff]
                %295 = vst [vmem:[%s227 + $0x108] sm:$0xff] %v294
                %v296 = vld [vmem:[%s226 + $0x210] sm:$0xff]
                %297 = vst [vmem:[%s227 + $0x110] sm:$0xff] %v296
                %v298 = vld [vmem:[%s226 + $0x218] sm:$0xff]
                %299 = vst [vmem:[%s227 + $0x118] sm:$0xff] %v298
                %v300 = vld [vmem:[%s226 + $0x240] sm:$0xff]
                %301 = vst [vmem:[%s227 + $0x120] sm:$0xff] %v300
                %v302 = vld [vmem:[%s226 + $0x248] sm:$0xff]
                %303 = vst [vmem:[%s227 + $0x128] sm:$0xff] %v302
                %v304 = vld [vmem:[%s226 + $0x250] sm:$0xff]
                %305 = vst [vmem:[%s227 + $0x130] sm:$0xff] %v304
                %v306 = vld [vmem:[%s226 + $0x258] sm:$0xff]
                %307 = vst [vmem:[%s227 + $0x138] sm:$0xff] %v306
                %v308 = vld [vmem:[%s226 + $0x280] sm:$0xff]
                %309 = vst [vmem:[%s227 + $0x140] sm:$0xff] %v308
                %v310 = vld [vmem:[%s226 + $0x288] sm:$0xff]
                %311 = vst [vmem:[%s227 + $0x148] sm:$0xff] %v310
                %v312 = vld [vmem:[%s226 + $0x290] sm:$0xff]
                %313 = vst [vmem:[%s227 + $0x150] sm:$0xff] %v312
                %v314 = vld [vmem:[%s226 + $0x298] sm:$0xff]
                %315 = vst [vmem:[%s227 + $0x158] sm:$0xff] %v314
                %v316 = vld [vmem:[%s226 + $0x2c0] sm:$0xff]
                %317 = vst [vmem:[%s227 + $0x160] sm:$0xff] %v316
                %v318 = vld [vmem:[%s226 + $0x2c8] sm:$0xff]
                %319 = vst [vmem:[%s227 + $0x168] sm:$0xff] %v318
                %v320 = vld [vmem:[%s226 + $0x2d0] sm:$0xff]
                %321 = vst [vmem:[%s227 + $0x170] sm:$0xff] %v320
                %v322 = vld [vmem:[%s226 + $0x2d8] sm:$0xff]
                %323 = vst [vmem:[%s227 + $0x178] sm:$0xff] %v322
                %v324 = vld [vmem:[%s226 + $0x300] sm:$0xff]
                %325 = vst [vmem:[%s227 + $0x180] sm:$0xff] %v324
                %v326 = vld [vmem:[%s226 + $0x308] sm:$0xff]
                %327 = vst [vmem:[%s227 + $0x188] sm:$0xff] %v326
                %v328 = vld [vmem:[%s226 + $0x310] sm:$0xff]
                %329 = vst [vmem:[%s227 + $0x190] sm:$0xff] %v328
                %v330 = vld [vmem:[%s226 + $0x318] sm:$0xff]
                %331 = vst [vmem:[%s227 + $0x198] sm:$0xff] %v330
                %v332 = vld [vmem:[%s226 + $0x340] sm:$0xff]
                %333 = vst [vmem:[%s227 + $0x1a0] sm:$0xff] %v332
                %v334 = vld [vmem:[%s226 + $0x348] sm:$0xff]
                %335 = vst [vmem:[%s227 + $0x1a8] sm:$0xff] %v334
                %v336 = vld [vmem:[%s226 + $0x350] sm:$0xff]
                %337 = vst [vmem:[%s227 + $0x1b0] sm:$0xff] %v336
                %v338 = vld [vmem:[%s226 + $0x358] sm:$0xff]
                %339 = vst [vmem:[%s227 + $0x1b8] sm:$0xff] %v338
                %v340 = vld [vmem:[%s226 + $0x380] sm:$0xff]
                %341 = vst [vmem:[%s227 + $0x1c0] sm:$0xff] %v340
                %v342 = vld [vmem:[%s226 + $0x388] sm:$0xff]
                %343 = vst [vmem:[%s227 + $0x1c8] sm:$0xff] %v342
                %v344 = vld [vmem:[%s226 + $0x390] sm:$0xff]
                %345 = vst [vmem:[%s227 + $0x1d0] sm:$0xff] %v344
                %v346 = vld [vmem:[%s226 + $0x398] sm:$0xff]
                %347 = vst [vmem:[%s227 + $0x1d8] sm:$0xff] %v346
                %v348 = vld [vmem:[%s226 + $0x3c0] sm:$0xff]
                %349 = vst [vmem:[%s227 + $0x1e0] sm:$0xff] %v348
                %v350 = vld [vmem:[%s226 + $0x3c8] sm:$0xff]
                %351 = vst [vmem:[%s227 + $0x1e8] sm:$0xff] %v350
                %v352 = vld [vmem:[%s226 + $0x3d0] sm:$0xff]
                %353 = vst [vmem:[%s227 + $0x1f0] sm:$0xff] %v352
                %v354 = vld [vmem:[%s226 + $0x3d8] sm:$0xff]
                %355 = vst [vmem:[%s227 + $0x1f8] sm:$0xff] %v354
                %v356 = vld [vmem:[%s226 + $0x400] sm:$0xff]
                %357 = vst [vmem:[%s227 + $0x200] sm:$0xff] %v356
                %v358 = vld [vmem:[%s226 + $0x408] sm:$0xff]
                %359 = vst [vmem:[%s227 + $0x208] sm:$0xff] %v358
                %v360 = vld [vmem:[%s226 + $0x410] sm:$0xff]
                %361 = vst [vmem:[%s227 + $0x210] sm:$0xff] %v360
                %v362 = vld [vmem:[%s226 + $0x418] sm:$0xff]
                %363 = vst [vmem:[%s227 + $0x218] sm:$0xff] %v362
                %v364 = vld [vmem:[%s226 + $0x440] sm:$0xff]
                %365 = vst [vmem:[%s227 + $0x220] sm:$0xff] %v364
                %v366 = vld [vmem:[%s226 + $0x448] sm:$0xff]
                %367 = vst [vmem:[%s227 + $0x228] sm:$0xff] %v366
                %v368 = vld [vmem:[%s226 + $0x450] sm:$0xff]
                %369 = vst [vmem:[%s227 + $0x230] sm:$0xff] %v368
                %v370 = vld [vmem:[%s226 + $0x458] sm:$0xff]
                %371 = vst [vmem:[%s227 + $0x238] sm:$0xff] %v370
                %v372 = vld [vmem:[%s226 + $0x480] sm:$0xff]
                %373 = vst [vmem:[%s227 + $0x240] sm:$0xff] %v372
                %v374 = vld [vmem:[%s226 + $0x488] sm:$0xff]
                %375 = vst [vmem:[%s227 + $0x248] sm:$0xff] %v374
                %v376 = vld [vmem:[%s226 + $0x490] sm:$0xff]
                %377 = vst [vmem:[%s227 + $0x250] sm:$0xff] %v376
                %v378 = vld [vmem:[%s226 + $0x498] sm:$0xff]
                %379 = vst [vmem:[%s227 + $0x258] sm:$0xff] %v378
                %v380 = vld [vmem:[%s226 + $0x4c0] sm:$0xff]
                %381 = vst [vmem:[%s227 + $0x260] sm:$0xff] %v380
                %v382 = vld [vmem:[%s226 + $0x4c8] sm:$0xff]
                %383 = vst [vmem:[%s227 + $0x268] sm:$0xff] %v382
                %v384 = vld [vmem:[%s226 + $0x4d0] sm:$0xff]
                %385 = vst [vmem:[%s227 + $0x270] sm:$0xff] %v384
                %v386 = vld [vmem:[%s226 + $0x4d8] sm:$0xff]
                %387 = vst [vmem:[%s227 + $0x278] sm:$0xff] %v386
                %v388 = vld [vmem:[%s226 + $0x500] sm:$0xff]
                %389 = vst [vmem:[%s227 + $0x280] sm:$0xff] %v388
                %v390 = vld [vmem:[%s226 + $0x508] sm:$0xff]
                %391 = vst [vmem:[%s227 + $0x288] sm:$0xff] %v390
                %v392 = vld [vmem:[%s226 + $0x510] sm:$0xff]
                %393 = vst [vmem:[%s227 + $0x290] sm:$0xff] %v392
                %v394 = vld [vmem:[%s226 + $0x518] sm:$0xff]
                %395 = vst [vmem:[%s227 + $0x298] sm:$0xff] %v394
                %v396 = vld [vmem:[%s226 + $0x540] sm:$0xff]
                %397 = vst [vmem:[%s227 + $0x2a0] sm:$0xff] %v396
                %v398 = vld [vmem:[%s226 + $0x548] sm:$0xff]
                %399 = vst [vmem:[%s227 + $0x2a8] sm:$0xff] %v398
                %v400 = vld [vmem:[%s226 + $0x550] sm:$0xff]
                %401 = vst [vmem:[%s227 + $0x2b0] sm:$0xff] %v400
                %v402 = vld [vmem:[%s226 + $0x558] sm:$0xff]
                %403 = vst [vmem:[%s227 + $0x2b8] sm:$0xff] %v402
                %v404 = vld [vmem:[%s226 + $0x580] sm:$0xff]
                %405 = vst [vmem:[%s227 + $0x2c0] sm:$0xff] %v404
                %v406 = vld [vmem:[%s226 + $0x588] sm:$0xff]
                %407 = vst [vmem:[%s227 + $0x2c8] sm:$0xff] %v406
                %v408 = vld [vmem:[%s226 + $0x590] sm:$0xff]
                %409 = vst [vmem:[%s227 + $0x2d0] sm:$0xff] %v408
                %v410 = vld [vmem:[%s226 + $0x598] sm:$0xff]
                %411 = vst [vmem:[%s227 + $0x2d8] sm:$0xff] %v410
                %v412 = vld [vmem:[%s226 + $0x5c0] sm:$0xff]
                %413 = vst [vmem:[%s227 + $0x2e0] sm:$0xff] %v412
                %v414 = vld [vmem:[%s226 + $0x5c8] sm:$0xff]
                %415 = vst [vmem:[%s227 + $0x2e8] sm:$0xff] %v414
                %v416 = vld [vmem:[%s226 + $0x5d0] sm:$0xff]
                %417 = vst [vmem:[%s227 + $0x2f0] sm:$0xff] %v416
                %v418 = vld [vmem:[%s226 + $0x5d8] sm:$0xff]
                %419 = vst [vmem:[%s227 + $0x2f8] sm:$0xff] %v418
                %v420 = vld [vmem:[%s226 + $0x600] sm:$0xff]
                %421 = vst [vmem:[%s227 + $0x300] sm:$0xff] %v420
                %v422 = vld [vmem:[%s226 + $0x608] sm:$0xff]
                %423 = vst [vmem:[%s227 + $0x308] sm:$0xff] %v422
                %v424 = vld [vmem:[%s226 + $0x610] sm:$0xff]
                %425 = vst [vmem:[%s227 + $0x310] sm:$0xff] %v424
                %v426 = vld [vmem:[%s226 + $0x618] sm:$0xff]
                %427 = vst [vmem:[%s227 + $0x318] sm:$0xff] %v426
                %v428 = vld [vmem:[%s226 + $0x640] sm:$0xff]
                %429 = vst [vmem:[%s227 + $0x320] sm:$0xff] %v428
                %v430 = vld [vmem:[%s226 + $0x648] sm:$0xff]
                %431 = vst [vmem:[%s227 + $0x328] sm:$0xff] %v430
                %v432 = vld [vmem:[%s226 + $0x650] sm:$0xff]
                %433 = vst [vmem:[%s227 + $0x330] sm:$0xff] %v432
                %v434 = vld [vmem:[%s226 + $0x658] sm:$0xff]
                %435 = vst [vmem:[%s227 + $0x338] sm:$0xff] %v434
                %v436 = vld [vmem:[%s226 + $0x680] sm:$0xff]
                %437 = vst [vmem:[%s227 + $0x340] sm:$0xff] %v436
                %v438 = vld [vmem:[%s226 + $0x688] sm:$0xff]
                %439 = vst [vmem:[%s227 + $0x348] sm:$0xff] %v438
                %v440 = vld [vmem:[%s226 + $0x690] sm:$0xff]
                %441 = vst [vmem:[%s227 + $0x350] sm:$0xff] %v440
                %v442 = vld [vmem:[%s226 + $0x698] sm:$0xff]
                %443 = vst [vmem:[%s227 + $0x358] sm:$0xff] %v442
                %v444 = vld [vmem:[%s226 + $0x6c0] sm:$0xff]
                %445 = vst [vmem:[%s227 + $0x360] sm:$0xff] %v444
                %v446 = vld [vmem:[%s226 + $0x6c8] sm:$0xff]
                %447 = vst [vmem:[%s227 + $0x368] sm:$0xff] %v446
                %v448 = vld [vmem:[%s226 + $0x6d0] sm:$0xff]
                %449 = vst [vmem:[%s227 + $0x370] sm:$0xff] %v448
                %v450 = vld [vmem:[%s226 + $0x6d8] sm:$0xff]
                %451 = vst [vmem:[%s227 + $0x378] sm:$0xff] %v450
                %v452 = vld [vmem:[%s226 + $0x700] sm:$0xff]
                %453 = vst [vmem:[%s227 + $0x380] sm:$0xff] %v452
                %v454 = vld [vmem:[%s226 + $0x708] sm:$0xff]
                %455 = vst [vmem:[%s227 + $0x388] sm:$0xff] %v454
                %v456 = vld [vmem:[%s226 + $0x710] sm:$0xff]
                %457 = vst [vmem:[%s227 + $0x390] sm:$0xff] %v456
                %v458 = vld [vmem:[%s226 + $0x718] sm:$0xff]
                %459 = vst [vmem:[%s227 + $0x398] sm:$0xff] %v458
                %v460 = vld [vmem:[%s226 + $0x740] sm:$0xff]
                %461 = vst [vmem:[%s227 + $0x3a0] sm:$0xff] %v460
                %v462 = vld [vmem:[%s226 + $0x748] sm:$0xff]
                %463 = vst [vmem:[%s227 + $0x3a8] sm:$0xff] %v462
                %v464 = vld [vmem:[%s226 + $0x750] sm:$0xff]
                %465 = vst [vmem:[%s227 + $0x3b0] sm:$0xff] %v464
                %v466 = vld [vmem:[%s226 + $0x758] sm:$0xff]
                %467 = vst [vmem:[%s227 + $0x3b8] sm:$0xff] %v466
                %v468 = vld [vmem:[%s226 + $0x780] sm:$0xff]
                %469 = vst [vmem:[%s227 + $0x3c0] sm:$0xff] %v468
                %v470 = vld [vmem:[%s226 + $0x788] sm:$0xff]
                %471 = vst [vmem:[%s227 + $0x3c8] sm:$0xff] %v470
                %v472 = vld [vmem:[%s226 + $0x790] sm:$0xff]
                %473 = vst [vmem:[%s227 + $0x3d0] sm:$0xff] %v472
                %v474 = vld [vmem:[%s226 + $0x798] sm:$0xff]
                %475 = vst [vmem:[%s227 + $0x3d8] sm:$0xff] %v474
                %v476 = vld [vmem:[%s226 + $0x7c0] sm:$0xff]
                %477 = vst [vmem:[%s227 + $0x3e0] sm:$0xff] %v476
                %v478 = vld [vmem:[%s226 + $0x7c8] sm:$0xff]
                %479 = vst [vmem:[%s227 + $0x3e8] sm:$0xff] %v478
                %v480 = vld [vmem:[%s226 + $0x7d0] sm:$0xff]
                %481 = vst [vmem:[%s227 + $0x3f0] sm:$0xff] %v480
                %v482 = vld [vmem:[%s226 + $0x7d8] sm:$0xff]
                %483 = vst [vmem:[%s227 + $0x3f8] sm:$0xff] %v482
              $region41: #{mlp_pallas.1} parent=35 // loop_footer
                %s225 = sadd.s32 1, %s221
              $region42: #{mlp_pallas.1} parent=35 // loop_footer_branch
                %220 = sbr.rel target = $region38
              $region43: #{mlp_pallas.1} parent=35 // loop_exit
                _
            $region36: #{mlp_pallas.1} parent=31 // pred_fallthru
              _
            // Predicated region
            $region44: #{mlp_pallas.1} parent=31 // pred_check
              _
            $region45: #{mlp_pallas.1} parent=31 // pred_check_branch
              %485 = sbr.rel target = $region47
            $region46: #{mlp_pallas.1} parent=31 // pred_region
              _
            $region47: #{mlp_pallas.1} parent=31 // pred_fallthru
              _
          $region32: #{mlp_pallas.1} parent=27 // pred_fallthru
            _
          %486 = vnop
        $region28: #{mlp_pallas.1} parent=19 // pred_fallthru
          _
        // Predicated region
        $region48: #{mlp_pallas.1} parent=19 // pred_check
          %p487 = pneg %p95
        $region49: #{mlp_pallas.1} parent=19 // pred_check_branch
          %489 = sbr.rel (%p487) target = $region51
        $region50: #{mlp_pallas.1} parent=19 // pred_region
          %s490 = smul.u32 4, %s19
          %p491 = scmp.lt.s32.totalorder %s490, 7
          %s492 = scalar_select %p491, %s490, 7
          %s493 = scalar_lea.vmem %s2, %s492
          %s494 = smul.u32 4, %s19
        $region51: #{mlp_pallas.1} parent=19 // pred_fallthru
          _
        // Predicated region
        $region52: #{mlp_pallas.1} parent=19 // pred_check
          %p495 = pneg %p121
        $region53: #{mlp_pallas.1} parent=19 // pred_check_branch
          %497 = sbr.rel (%p495) target = $region55
        $region54: #{mlp_pallas.1} parent=19 // pred_region
          %s498 = smul.u32 64, %s19
          %p499 = scmp.lt.s32.totalorder %s498, 127
          %s500 = scalar_select %p499, %s498, 127
          %s501 = smul.addr %s500, 2
          %s502 = smul.addr %s501, 8
          %s503 = scalar_lea.vmem %s3, %s502
          %s504 = smul.u32 64, %s19
        $region55: #{mlp_pallas.1} parent=19 // pred_fallthru
          _
      $region20: #{mlp_pallas.1} parent=5 // pred_fallthru
        _
      %p505 = scmp.le.s32.totalorder 1, %s11
      %p506 = scmp.lt.s32.totalorder %s11, 5
      %p507 = pnand %p505, %p506
      %p508 = pneg %p507
      // Predicated region
      $region56: #{mlp_pallas.1} parent=5 // pred_check
        _
      $region57: #{mlp_pallas.1} parent=5 // pred_check_branch
        %510 = sbr.rel (%p507) target = $region59
      $region58: #{mlp_pallas.1} parent=5 // pred_region
        %s511 = ssub.s32 %s11, 1
        %s512 = sand.u32 %s62, 1
        %s513 = sand.u32 %s62, 1
        %s514 = smul.addr %s513, 1024
        %s515 = scalar_lea.vmem [#allocation3], %s514
        // Predicated region
        $region60: #{mlp_pallas.1} parent=58 // pred_check
          %p516 = pneg %p75
        $region61: #{mlp_pallas.1} parent=58 // pred_check_branch
          %518 = sbr.rel (%p516) target = $region63
        $region62: #{mlp_pallas.1} parent=58 // pred_region
          _
        $region63: #{mlp_pallas.1} parent=58 // pred_fallthru
          _
        %s519 = smul.u32 25, %s20
        %p520 = scmp.lt.s32.totalorder %s519, 49
        %s521 = scalar_select %p520, %s519, 49
        %s522 = smul.addr %s521, 2
        %s523 = smul.addr %s522, 8
        %s524 = scalar_lea.vmem %s0, %s523
        %p525 = pneg %p49
        %p526 = pneg %p46
        %s527 = sand.u32 %s62, 1
        %s528 = sand.u32 %s62, 1
        %s529 = smul.addr %s528, 1024
        %s530 = scalar_lea.vmem [#allocation3], %s529
        %p531 = pneg %p75
        %p532 = pneg %p72
        %s533 = smul.u32 4, %s21
        %p534 = scmp.lt.s32.totalorder %s533, 7
        %s535 = scalar_select %p534, %s533, 7
        %s536 = scalar_lea.vmem %s2, %s535
        %p537 = pneg %p101
        %p538 = pneg %p98
        %s539 = smul.u32 64, %s21
        %p540 = scmp.lt.s32.totalorder %s539, 127
        %s541 = scalar_select %p540, %s539, 127
        %s542 = smul.addr %s541, 2
        %s543 = smul.addr %s542, 8
        %s544 = scalar_lea.vmem %s3, %s543
        %p545 = pneg %p127
        %p546 = pneg %p124
        %p547 = pneg %p148
        %p548 = pneg %p145
        %p549 = pneg %p174
        %p550 = pneg %p171
        %s551 = smul.u32 25, %s20
        %p552 = scmp.lt.s32.totalorder %s551, 49
        %s553 = scalar_select %p552, %s551, 49
        %s554 = smul.addr %s553, 2
        %s555 = smul.addr %s554, 8
        %s556 = scalar_lea.vmem %s5, %s555
        %s557 = smul.u32 25, %s20
        %p558 = scmp.lt.s32.totalorder %s557, 49
        %s559 = scalar_select %p558, %s557, 49
        %s560 = smul.addr %s559, 2
        %s561 = smul.addr %s560, 8
        %s562 = scalar_lea.vmem %s0, %s561
        %s563 = smul.u32 25, %s20
        %s564 = smul.u32 4, %s21
        %s565 = smul.u32 4, %s21
        %p566 = scmp.lt.s32.totalorder %s565, 7
        %s567 = scalar_select %p566, %s565, 7
        %s568 = scalar_lea.vmem %s2, %s567
        %s569 = smul.u32 4, %s21
        %s570 = smul.u32 64, %s21
        %p571 = scmp.lt.s32.totalorder %s570, 127
        %s572 = scalar_select %p571, %s570, 127
        %s573 = smul.addr %s572, 2
        %s574 = smul.addr %s573, 8
        %s575 = scalar_lea.vmem %s3, %s574
        %s576 = smul.u32 64, %s21
        %s577 = smul.u32 25, %s20
        %p578 = scmp.lt.s32.totalorder %s577, 49
        %s579 = scalar_select %p578, %s577, 49
        %s580 = smul.addr %s579, 2
        %s581 = smul.addr %s580, 8
        %s582 = scalar_lea.vmem %s5, %s581
        %s583 = smul.u32 25, %s20
        %p584 = scmp.eq.s32.totalorder %s21, 0
        // Predicated region
        $region64: #{mlp_pallas.1} parent=58 // pred_check
          %p585 = pneg %p584
        $region65: #{mlp_pallas.1} parent=58 // pred_check_branch
          %587 = sbr.rel (%p585) target = $region67
        $region66: #{mlp_pallas.1} parent=58 // pred_region
          %588 = vst [vmem:[#allocation2] sm:$0xff] 0.0
          %589 = vst [vmem:[#allocation2 + $0x8] sm:$0xff] 0.0
          %590 = vst [vmem:[#allocation2 + $0x10] sm:$0xff] 0.0
          %591 = vst [vmem:[#allocation2 + $0x18] sm:$0xff] 0.0
          %592 = vst [vmem:[#allocation2 + $0x20] sm:$0xff] 0.0
          %593 = vst [vmem:[#allocation2 + $0x28] sm:$0xff] 0.0
          %594 = vst [vmem:[#allocation2 + $0x30] sm:$0xff] 0.0
          %595 = vst [vmem:[#allocation2 + $0x38] sm:$0xff] 0.0
          %596 = vst [vmem:[#allocation2 + $0x40] sm:$0xff] 0.0
          %597 = vst [vmem:[#allocation2 + $0x48] sm:$0xff] 0.0
          %598 = vst [vmem:[#allocation2 + $0x50] sm:$0xff] 0.0
          %599 = vst [vmem:[#allocation2 + $0x58] sm:$0xff] 0.0
          %600 = vst [vmem:[#allocation2 + $0x60] sm:$0xff] 0.0
          %601 = vst [vmem:[#allocation2 + $0x68] sm:$0xff] 0.0
          %602 = vst [vmem:[#allocation2 + $0x70] sm:$0xff] 0.0
          %603 = vst [vmem:[#allocation2 + $0x78] sm:$0xff] 0.0
          %604 = vst [vmem:[#allocation2 + $0x80] sm:$0xff] 0.0
          %605 = vst [vmem:[#allocation2 + $0x88] sm:$0xff] 0.0
          %606 = vst [vmem:[#allocation2 + $0x90] sm:$0xff] 0.0
          %607 = vst [vmem:[#allocation2 + $0x98] sm:$0xff] 0.0
          %608 = vst [vmem:[#allocation2 + $0xa0] sm:$0xff] 0.0
          %609 = vst [vmem:[#allocation2 + $0xa8] sm:$0xff] 0.0
          %610 = vst [vmem:[#allocation2 + $0xb0] sm:$0xff] 0.0
          %611 = vst [vmem:[#allocation2 + $0xb8] sm:$0xff] 0.0
          %612 = vst [vmem:[#allocation2 + $0xc0] sm:$0xff] 0.0
          %613 = vst [vmem:[#allocation2 + $0xc8] sm:$0xff] 0.0
          %614 = vst [vmem:[#allocation2 + $0xd0] sm:$0xff] 0.0
          %615 = vst [vmem:[#allocation2 + $0xd8] sm:$0xff] 0.0
          %616 = vst [vmem:[#allocation2 + $0xe0] sm:$0xff] 0.0
          %617 = vst [vmem:[#allocation2 + $0xe8] sm:$0xff] 0.0
          %618 = vst [vmem:[#allocation2 + $0xf0] sm:$0xff] 0.0
          %619 = vst [vmem:[#allocation2 + $0xf8] sm:$0xff] 0.0
          %620 = vst [vmem:[#allocation2 + $0x100] sm:$0xff] 0.0
          %621 = vst [vmem:[#allocation2 + $0x108] sm:$0xff] 0.0
          %622 = vst [vmem:[#allocation2 + $0x110] sm:$0xff] 0.0
          %623 = vst [vmem:[#allocation2 + $0x118] sm:$0xff] 0.0
          %624 = vst [vmem:[#allocation2 + $0x120] sm:$0xff] 0.0
          %625 = vst [vmem:[#allocation2 + $0x128] sm:$0xff] 0.0
          %626 = vst [vmem:[#allocation2 + $0x130] sm:$0xff] 0.0
          %627 = vst [vmem:[#allocation2 + $0x138] sm:$0xff] 0.0
          %628 = vst [vmem:[#allocation2 + $0x140] sm:$0xff] 0.0
          %629 = vst [vmem:[#allocation2 + $0x148] sm:$0xff] 0.0
          %630 = vst [vmem:[#allocation2 + $0x150] sm:$0xff] 0.0
          %631 = vst [vmem:[#allocation2 + $0x158] sm:$0xff] 0.0
          %632 = vst [vmem:[#allocation2 + $0x160] sm:$0xff] 0.0
          %633 = vst [vmem:[#allocation2 + $0x168] sm:$0xff] 0.0
          %634 = vst [vmem:[#allocation2 + $0x170] sm:$0xff] 0.0
          %635 = vst [vmem:[#allocation2 + $0x178] sm:$0xff] 0.0
          %636 = vst [vmem:[#allocation2 + $0x180] sm:$0xff] 0.0
          %637 = vst [vmem:[#allocation2 + $0x188] sm:$0xff] 0.0
        $region67: #{mlp_pallas.1} parent=58 // pred_fallthru
          _
        %v638 = vld [vmem:[%s562] sm:$0xff]
        %v639 = vld [vmem:[%s562 + $0x8] sm:$0xff]
        %v640 = vld [vmem:[%s562 + $0x10] sm:$0xff]
        %v641 = vld [vmem:[%s562 + $0x18] sm:$0xff]
        %v642 = vld [vmem:[%s562 + $0x20] sm:$0xff]
        %v643 = vld [vmem:[%s562 + $0x28] sm:$0xff]
        %v644 = vld [vmem:[%s562 + $0x30] sm:$0xff]
        %v645 = vld [vmem:[%s562 + $0x38] sm:$0xff]
        %v646 = vld [vmem:[%s562 + $0x40] sm:$0xff]
        %v647 = vld [vmem:[%s562 + $0x48] sm:$0xff]
        %v648 = vld [vmem:[%s562 + $0x50] sm:$0xff]
        %v649 = vld [vmem:[%s562 + $0x58] sm:$0xff]
        %v650 = vld [vmem:[%s562 + $0x60] sm:$0xff]
        %v651 = vld [vmem:[%s562 + $0x68] sm:$0xff]
        %v652 = vld [vmem:[%s562 + $0x70] sm:$0xff]
        %v653 = vld [vmem:[%s562 + $0x78] sm:$0xff]
        %v654 = vld [vmem:[%s562 + $0x80] sm:$0xff]
        %v655 = vld [vmem:[%s562 + $0x88] sm:$0xff]
        %v656 = vld [vmem:[%s562 + $0x90] sm:$0xff]
        %v657 = vld [vmem:[%s562 + $0x98] sm:$0xff]
        %v658 = vld [vmem:[%s562 + $0xa0] sm:$0xff]
        %v659 = vld [vmem:[%s562 + $0xa8] sm:$0xff]
        %v660 = vld [vmem:[%s562 + $0xb0] sm:$0xff]
        %v661 = vld [vmem:[%s562 + $0xb8] sm:$0xff]
        %v662 = vld [vmem:[%s562 + $0xc0] sm:$0xff]
        %v663 = vld [vmem:[%s562 + $0xc8] sm:$0xff]
        %v664 = vld [vmem:[%s562 + $0xd0] sm:$0xff]
        %v665 = vld [vmem:[%s562 + $0xd8] sm:$0xff]
        %v666 = vld [vmem:[%s562 + $0xe0] sm:$0xff]
        %v667 = vld [vmem:[%s562 + $0xe8] sm:$0xff]
        %v668 = vld [vmem:[%s562 + $0xf0] sm:$0xff]
        %v669 = vld [vmem:[%s562 + $0xf8] sm:$0xff]
        %v670 = vld [vmem:[%s562 + $0x100] sm:$0xff]
        %v671 = vld [vmem:[%s562 + $0x108] sm:$0xff]
        %v672 = vld [vmem:[%s562 + $0x110] sm:$0xff]
        %v673 = vld [vmem:[%s562 + $0x118] sm:$0xff]
        %v674 = vld [vmem:[%s562 + $0x120] sm:$0xff]
        %v675 = vld [vmem:[%s562 + $0x128] sm:$0xff]
        %v676 = vld [vmem:[%s562 + $0x130] sm:$0xff]
        %v677 = vld [vmem:[%s562 + $0x138] sm:$0xff]
        %v678 = vld [vmem:[%s562 + $0x140] sm:$0xff]
        %v679 = vld [vmem:[%s562 + $0x148] sm:$0xff]
        %v680 = vld [vmem:[%s562 + $0x150] sm:$0xff]
        %v681 = vld [vmem:[%s562 + $0x158] sm:$0xff]
        %v682 = vld [vmem:[%s562 + $0x160] sm:$0xff]
        %v683 = vld [vmem:[%s562 + $0x168] sm:$0xff]
        %v684 = vld [vmem:[%s562 + $0x170] sm:$0xff]
        %v685 = vld [vmem:[%s562 + $0x178] sm:$0xff]
        %v686 = vld [vmem:[%s562 + $0x180] sm:$0xff]
        %v687 = vld [vmem:[%s562 + $0x188] sm:$0xff]
        %v688 = vld [vmem:[%s515] sm:$0xff]
        %v689 = vld [vmem:[%s515 + $0x8] sm:$0xff]
        %v690 = vld [vmem:[%s515 + $0x10] sm:$0xff]
        %v691 = vld [vmem:[%s515 + $0x18] sm:$0xff]
        %v692 = vld [vmem:[%s515 + $0x20] sm:$0xff]
        %v693 = vld [vmem:[%s515 + $0x28] sm:$0xff]
        %v694 = vld [vmem:[%s515 + $0x30] sm:$0xff]
        %v695 = vld [vmem:[%s515 + $0x38] sm:$0xff]
        %v696 = vld [vmem:[%s515 + $0x40] sm:$0xff]
        %v697 = vld [vmem:[%s515 + $0x48] sm:$0xff]
        %v698 = vld [vmem:[%s515 + $0x50] sm:$0xff]
        %v699 = vld [vmem:[%s515 + $0x58] sm:$0xff]
        %v700 = vld [vmem:[%s515 + $0x60] sm:$0xff]
        %v701 = vld [vmem:[%s515 + $0x68] sm:$0xff]
        %v702 = vld [vmem:[%s515 + $0x70] sm:$0xff]
        %v703 = vld [vmem:[%s515 + $0x78] sm:$0xff]
        %v704 = vld [vmem:[%s515 + $0x80] sm:$0xff]
        %v705 = vld [vmem:[%s515 + $0x88] sm:$0xff]
        %v706 = vld [vmem:[%s515 + $0x90] sm:$0xff]
        %v707 = vld [vmem:[%s515 + $0x98] sm:$0xff]
        %v708 = vld [vmem:[%s515 + $0xa0] sm:$0xff]
        %v709 = vld [vmem:[%s515 + $0xa8] sm:$0xff]
        %v710 = vld [vmem:[%s515 + $0xb0] sm:$0xff]
        %v711 = vld [vmem:[%s515 + $0xb8] sm:$0xff]
        %v712 = vld [vmem:[%s515 + $0xc0] sm:$0xff]
        %v713 = vld [vmem:[%s515 + $0xc8] sm:$0xff]
        %v714 = vld [vmem:[%s515 + $0xd0] sm:$0xff]
        %v715 = vld [vmem:[%s515 + $0xd8] sm:$0xff]
        %v716 = vld [vmem:[%s515 + $0xe0] sm:$0xff]
        %v717 = vld [vmem:[%s515 + $0xe8] sm:$0xff]
        %v718 = vld [vmem:[%s515 + $0xf0] sm:$0xff]
        %v719 = vld [vmem:[%s515 + $0xf8] sm:$0xff]
        %v720 = vld [vmem:[%s515 + $0x100] sm:$0xff]
        %v721 = vld [vmem:[%s515 + $0x108] sm:$0xff]
        %v722 = vld [vmem:[%s515 + $0x110] sm:$0xff]
        %v723 = vld [vmem:[%s515 + $0x118] sm:$0xff]
        %v724 = vld [vmem:[%s515 + $0x120] sm:$0xff]
        %v725 = vld [vmem:[%s515 + $0x128] sm:$0xff]
        %v726 = vld [vmem:[%s515 + $0x130] sm:$0xff]
        %v727 = vld [vmem:[%s515 + $0x138] sm:$0xff]
        %v728 = vld [vmem:[%s515 + $0x140] sm:$0xff]
        %v729 = vld [vmem:[%s515 + $0x148] sm:$0xff]
        %v730 = vld [vmem:[%s515 + $0x150] sm:$0xff]
        %v731 = vld [vmem:[%s515 + $0x158] sm:$0xff]
        %v732 = vld [vmem:[%s515 + $0x160] sm:$0xff]
        %v733 = vld [vmem:[%s515 + $0x168] sm:$0xff]
        %v734 = vld [vmem:[%s515 + $0x170] sm:$0xff]
        %v735 = vld [vmem:[%s515 + $0x178] sm:$0xff]
        %v736 = vld [vmem:[%s515 + $0x180] sm:$0xff]
        %v737 = vld [vmem:[%s515 + $0x188] sm:$0xff]
        %v738 = vld [vmem:[%s515 + $0x190] sm:$0xff]
        %v739 = vld [vmem:[%s515 + $0x198] sm:$0xff]
        %v740 = vld [vmem:[%s515 + $0x1a0] sm:$0xff]
        %v741 = vld [vmem:[%s515 + $0x1a8] sm:$0xff]
        %v742 = vld [vmem:[%s515 + $0x1b0] sm:$0xff]
        %v743 = vld [vmem:[%s515 + $0x1b8] sm:$0xff]
        %v744 = vld [vmem:[%s515 + $0x1c0] sm:$0xff]
        %v745 = vld [vmem:[%s515 + $0x1c8] sm:$0xff]
        %v746 = vld [vmem:[%s515 + $0x1d0] sm:$0xff]
        %v747 = vld [vmem:[%s515 + $0x1d8] sm:$0xff]
        %v748 = vld [vmem:[%s515 + $0x1e0] sm:$0xff]
        %v749 = vld [vmem:[%s515 + $0x1e8] sm:$0xff]
        %v750 = vld [vmem:[%s515 + $0x1f0] sm:$0xff]
        %v751 = vld [vmem:[%s515 + $0x1f8] sm:$0xff]
        %v752 = vld [vmem:[%s515 + $0x200] sm:$0xff]
        %v753 = vld [vmem:[%s515 + $0x208] sm:$0xff]
        %v754 = vld [vmem:[%s515 + $0x210] sm:$0xff]
        %v755 = vld [vmem:[%s515 + $0x218] sm:$0xff]
        %v756 = vld [vmem:[%s515 + $0x220] sm:$0xff]
        %v757 = vld [vmem:[%s515 + $0x228] sm:$0xff]
        %v758 = vld [vmem:[%s515 + $0x230] sm:$0xff]
        %v759 = vld [vmem:[%s515 + $0x238] sm:$0xff]
        %v760 = vld [vmem:[%s515 + $0x240] sm:$0xff]
        %v761 = vld [vmem:[%s515 + $0x248] sm:$0xff]
        %v762 = vld [vmem:[%s515 + $0x250] sm:$0xff]
        %v763 = vld [vmem:[%s515 + $0x258] sm:$0xff]
        %v764 = vld [vmem:[%s515 + $0x260] sm:$0xff]
        %v765 = vld [vmem:[%s515 + $0x268] sm:$0xff]
        %v766 = vld [vmem:[%s515 + $0x270] sm:$0xff]
        %v767 = vld [vmem:[%s515 + $0x278] sm:$0xff]
        %v768 = vld [vmem:[%s515 + $0x280] sm:$0xff]
        %v769 = vld [vmem:[%s515 + $0x288] sm:$0xff]
        %v770 = vld [vmem:[%s515 + $0x290] sm:$0xff]
        %v771 = vld [vmem:[%s515 + $0x298] sm:$0xff]
        %v772 = vld [vmem:[%s515 + $0x2a0] sm:$0xff]
        %v773 = vld [vmem:[%s515 + $0x2a8] sm:$0xff]
        %v774 = vld [vmem:[%s515 + $0x2b0] sm:$0xff]
        %v775 = vld [vmem:[%s515 + $0x2b8] sm:$0xff]
        %v776 = vld [vmem:[%s515 + $0x2c0] sm:$0xff]
        %v777 = vld [vmem:[%s515 + $0x2c8] sm:$0xff]
        %v778 = vld [vmem:[%s515 + $0x2d0] sm:$0xff]
        %v779 = vld [vmem:[%s515 + $0x2d8] sm:$0xff]
        %v780 = vld [vmem:[%s515 + $0x2e0] sm:$0xff]
        %v781 = vld [vmem:[%s515 + $0x2e8] sm:$0xff]
        %v782 = vld [vmem:[%s515 + $0x2f0] sm:$0xff]
        %v783 = vld [vmem:[%s515 + $0x2f8] sm:$0xff]
        %v784 = vld [vmem:[%s515 + $0x300] sm:$0xff]
        %v785 = vld [vmem:[%s515 + $0x308] sm:$0xff]
        %v786 = vld [vmem:[%s515 + $0x310] sm:$0xff]
        %v787 = vld [vmem:[%s515 + $0x318] sm:$0xff]
        %v788 = vld [vmem:[%s515 + $0x320] sm:$0xff]
        %v789 = vld [vmem:[%s515 + $0x328] sm:$0xff]
        %v790 = vld [vmem:[%s515 + $0x330] sm:$0xff]
        %v791 = vld [vmem:[%s515 + $0x338] sm:$0xff]
        %v792 = vld [vmem:[%s515 + $0x340] sm:$0xff]
        %v793 = vld [vmem:[%s515 + $0x348] sm:$0xff]
        %v794 = vld [vmem:[%s515 + $0x350] sm:$0xff]
        %v795 = vld [vmem:[%s515 + $0x358] sm:$0xff]
        %v796 = vld [vmem:[%s515 + $0x360] sm:$0xff]
        %v797 = vld [vmem:[%s515 + $0x368] sm:$0xff]
        %v798 = vld [vmem:[%s515 + $0x370] sm:$0xff]
        %v799 = vld [vmem:[%s515 + $0x378] sm:$0xff]
        %v800 = vld [vmem:[%s515 + $0x380] sm:$0xff]
        %v801 = vld [vmem:[%s515 + $0x388] sm:$0xff]
        %v802 = vld [vmem:[%s515 + $0x390] sm:$0xff]
        %v803 = vld [vmem:[%s515 + $0x398] sm:$0xff]
        %v804 = vld [vmem:[%s515 + $0x3a0] sm:$0xff]
        %v805 = vld [vmem:[%s515 + $0x3a8] sm:$0xff]
        %v806 = vld [vmem:[%s515 + $0x3b0] sm:$0xff]
        %v807 = vld [vmem:[%s515 + $0x3b8] sm:$0xff]
        %v808 = vld [vmem:[%s515 + $0x3c0] sm:$0xff]
        %v809 = vld [vmem:[%s515 + $0x3c8] sm:$0xff]
        %v810 = vld [vmem:[%s515 + $0x3d0] sm:$0xff]
        %v811 = vld [vmem:[%s515 + $0x3d8] sm:$0xff]
        %v812 = vld [vmem:[%s515 + $0x3e0] sm:$0xff]
        %v813 = vld [vmem:[%s515 + $0x3e8] sm:$0xff]
        %v814 = vld [vmem:[%s515 + $0x3f0] sm:$0xff]
        %v815 = vld [vmem:[%s515 + $0x3f8] sm:$0xff]
        %v816 = vld [vmem:[%s568] sm:$0xf]
        %v818 = vlaneseq
        %v819 = vshrl.u32 %v818, 7
        %v820 = vsub.s32 0, %v819
        %v821 = vrot.slane %v816, %v820
        %v822 = vlaneseq
        %v823 = vshrl.u32 %v822, 7
        %v824 = vsub.s32 1, %v823
        %v825 = vrot.slane %v816, %v824
        %v826 = vlaneseq
        %v827 = vshrl.u32 %v826, 7
        %v828 = vsub.s32 2, %v827
        %v829 = vrot.slane %v816, %v828
        %v830 = vlaneseq
        %v831 = vshrl.u32 %v830, 7
        %v832 = vsub.s32 3, %v831
        %v833 = vrot.slane %v816, %v832
        %838 = vmatprep.subr.mxu0 %v749
        %839 = vmatpush1.msra.mxu0 %v748
        %840 = vmatprep.subr.mxu0 %v745
        %841 = vmatpush1.msra.mxu0 %v744
        %842 = vmatprep.subr.mxu0 %v741
        %843 = vmatpush1.msra.mxu0 %v740
        %844 = vmatprep.subr.mxu0 %v737
        %845 = vmatpush1.msra.mxu0 %v736
        %846 = vmatprep.subr.mxu0 %v733
        %847 = vmatpush1.msra.mxu0 %v732
        %848 = vmatprep.subr.mxu0 %v729
        %849 = vmatpush1.msra.mxu0 %v728
        %850 = vmatprep.subr.mxu0 %v725
        %851 = vmatpush1.msra.mxu0 %v724
        %852 = vmatprep.subr.mxu0 %v721
        %853 = vmatpush1.msra.mxu0 %v720
        %854 = vmatprep.subr.mxu0 %v717
        %855 = vmatpush1.msra.mxu0 %v716
        %856 = vmatprep.subr.mxu0 %v713
        %857 = vmatpush1.msra.mxu0 %v712
        %858 = vmatprep.subr.mxu0 %v709
        %859 = vmatpush1.msra.mxu0 %v708
        %860 = vmatprep.subr.mxu0 %v705
        %861 = vmatpush1.msra.mxu0 %v704
        %862 = vmatprep.subr.mxu0 %v701
        %863 = vmatpush1.msra.mxu0 %v700
        %864 = vmatprep.subr.mxu0 %v697
        %865 = vmatpush1.msra.mxu0 %v696
        %866 = vmatprep.subr.mxu0 %v693
        %867 = vmatpush1.msra.mxu0 %v692
        %868 = vmatprep.subr.mxu0 %v689
        %869 = vmatpush1.msra.mxu0 %v688
        %870 = vmatprep.subr.mxu0 %v813
        %871 = vmatpush2.msra.mxu0 %v812
        %872 = vmatprep.subr.mxu0 %v809
        %873 = vmatpush2.msra.mxu0 %v808
        %874 = vmatprep.subr.mxu0 %v805
        %875 = vmatpush2.msra.mxu0 %v804
        %876 = vmatprep.subr.mxu0 %v801
        %877 = vmatpush2.msra.mxu0 %v800
        %878 = vmatprep.subr.mxu0 %v797
        %879 = vmatpush2.msra.mxu0 %v796
        %880 = vmatprep.subr.mxu0 %v793
        %881 = vmatpush2.msra.mxu0 %v792
        %882 = vmatprep.subr.mxu0 %v789
        %883 = vmatpush2.msra.mxu0 %v788
        %884 = vmatprep.subr.mxu0 %v785
        %885 = vmatpush2.msra.mxu0 %v784
        %886 = vmatprep.subr.mxu0 %v781
        %887 = vmatpush2.msra.mxu0 %v780
        %888 = vmatprep.subr.mxu0 %v777
        %889 = vmatpush2.msra.mxu0 %v776
        %890 = vmatprep.subr.mxu0 %v773
        %891 = vmatpush2.msra.mxu0 %v772
        %892 = vmatprep.subr.mxu0 %v769
        %893 = vmatpush2.msra.mxu0 %v768
        %894 = vmatprep.subr.mxu0 %v765
        %895 = vmatpush2.msra.mxu0 %v764
        %896 = vmatprep.subr.mxu0 %v761
        %897 = vmatpush2.msra.mxu0 %v760
        %898 = vmatprep.subr.mxu0 %v757
        %899 = vmatpush2.msra.mxu0 %v756
        %900 = vmatprep.subr.mxu0 %v753
        %901 = vmatpush2.msra.mxu0 %v752
        %902 = vmatprep.mubr.f32.mxu0 %v639
        %903 = vmatmul.mubr.f32.gmra.mxu0 %v638
        %v904 = vpop.f32.mrf.mxu0
        %v905 = vadd.f32 %v821, %v904
        %v906 = vpop.f32.mrf.mxu0
        %v907 = vadd.f32 %v825, %v906
        %908 = vmatprep.mubr.f32.mxu0 %v641
        %909 = vmatmul.mubr.f32.gmra.mxu0 %v640
        %v910 = vpop.f32.mrf.mxu0
        %v911 = vadd.f32 %v821, %v910
        %v912 = vpop.f32.mrf.mxu0
        %v913 = vadd.f32 %v825, %v912
        %914 = vmatprep.mubr.f32.mxu0 %v643
        %915 = vmatmul.mubr.f32.gmra.mxu0 %v642
        %v916 = vpop.f32.mrf.mxu0
        %v917 = vadd.f32 %v821, %v916
        %v918 = vpop.f32.mrf.mxu0
        %v919 = vadd.f32 %v825, %v918
        %920 = vmatprep.mubr.f32.mxu0 %v645
        %921 = vmatmul.mubr.f32.gmra.mxu0 %v644
        %v922 = vpop.f32.mrf.mxu0
        %v923 = vadd.f32 %v821, %v922
        %v924 = vpop.f32.mrf.mxu0
        %v925 = vadd.f32 %v825, %v924
        %926 = vmatprep.mubr.f32.mxu0 %v647
        %927 = vmatmul.mubr.f32.gmra.mxu0 %v646
        %v928 = vpop.f32.mrf.mxu0
        %v929 = vadd.f32 %v821, %v928
        %v930 = vpop.f32.mrf.mxu0
        %v931 = vadd.f32 %v825, %v930
        %932 = vmatprep.mubr.f32.mxu0 %v649
        %933 = vmatmul.mubr.f32.gmra.mxu0 %v648
        %v934 = vpop.f32.mrf.mxu0
        %v935 = vadd.f32 %v821, %v934
        %v936 = vpop.f32.mrf.mxu0
        %v937 = vadd.f32 %v825, %v936
        %938 = vmatprep.mubr.f32.mxu0 %v651
        %939 = vmatmul.mubr.f32.gmra.mxu0 %v650
        %v940 = vpop.f32.mrf.mxu0
        %v941 = vadd.f32 %v821, %v940
        %v942 = vpop.f32.mrf.mxu0
        %v943 = vadd.f32 %v825, %v942
        %944 = vmatprep.mubr.f32.mxu0 %v653
        %945 = vmatmul.mubr.f32.gmra.mxu0 %v652
        %v946 = vpop.f32.mrf.mxu0
        %v947 = vadd.f32 %v821, %v946
        %v948 = vpop.f32.mrf.mxu0
        %v949 = vadd.f32 %v825, %v948
        %950 = vmatprep.mubr.f32.mxu0 %v655
        %951 = vmatmul.mubr.f32.gmra.mxu0 %v654
        %v952 = vpop.f32.mrf.mxu0
        %v953 = vadd.f32 %v821, %v952
        %v954 = vpop.f32.mrf.mxu0
        %v955 = vadd.f32 %v825, %v954
        %956 = vmatprep.mubr.f32.mxu0 %v657
        %957 = vmatmul.mubr.f32.gmra.mxu0 %v656
        %v958 = vpop.f32.mrf.mxu0
        %v959 = vadd.f32 %v821, %v958
        %v960 = vpop.f32.mrf.mxu0
        %v961 = vadd.f32 %v825, %v960
        %962 = vmatprep.mubr.f32.mxu0 %v659
        %963 = vmatmul.mubr.f32.gmra.mxu0 %v658
        %v964 = vpop.f32.mrf.mxu0
        %v965 = vadd.f32 %v821, %v964
        %v966 = vpop.f32.mrf.mxu0
        %v967 = vadd.f32 %v825, %v966
        %968 = vmatprep.mubr.f32.mxu0 %v661
        %969 = vmatmul.mubr.f32.gmra.mxu0 %v660
        %v970 = vpop.f32.mrf.mxu0
        %v971 = vadd.f32 %v821, %v970
        %v972 = vpop.f32.mrf.mxu0
        %v973 = vadd.f32 %v825, %v972
        %974 = vmatprep.mubr.f32.mxu0 %v663
        %975 = vmatmul.mubr.f32.gmra.mxu0 %v662
        %v976 = vpop.f32.mrf.mxu0
        %v977 = vadd.f32 %v821, %v976
        %v978 = vpop.f32.mrf.mxu0
        %v979 = vadd.f32 %v825, %v978
        %980 = vmatprep.mubr.f32.mxu0 %v665
        %981 = vmatmul.mubr.f32.gmra.mxu0 %v664
        %v982 = vpop.f32.mrf.mxu0
        %v983 = vadd.f32 %v821, %v982
        %v984 = vpop.f32.mrf.mxu0
        %v985 = vadd.f32 %v825, %v984
        %986 = vmatprep.mubr.f32.mxu0 %v667
        %987 = vmatmul.mubr.f32.gmra.mxu0 %v666
        %v988 = vpop.f32.mrf.mxu0
        %v989 = vadd.f32 %v821, %v988
        %v990 = vpop.f32.mrf.mxu0
        %v991 = vadd.f32 %v825, %v990
        %992 = vmatprep.mubr.f32.mxu0 %v669
        %993 = vmatmul.mubr.f32.gmra.mxu0 %v668
        %v994 = vpop.f32.mrf.mxu0
        %v995 = vadd.f32 %v821, %v994
        %v996 = vpop.f32.mrf.mxu0
        %v997 = vadd.f32 %v825, %v996
        %998 = vmatprep.mubr.f32.mxu0 %v671
        %999 = vmatmul.mubr.f32.gmra.mxu0 %v670
        %v1000 = vpop.f32.mrf.mxu0
        %v1001 = vadd.f32 %v821, %v1000
        %v1002 = vpop.f32.mrf.mxu0
        %v1003 = vadd.f32 %v825, %v1002
        %1004 = vmatprep.mubr.f32.mxu0 %v673
        %1005 = vmatmul.mubr.f32.gmra.mxu0 %v672
        %v1006 = vpop.f32.mrf.mxu0
        %v1007 = vadd.f32 %v821, %v1006
        %v1008 = vpop.f32.mrf.mxu0
        %v1009 = vadd.f32 %v825, %v1008
        %1010 = vmatprep.mubr.f32.mxu0 %v675
        %1011 = vmatmul.mubr.f32.gmra.mxu0 %v674
        %v1012 = vpop.f32.mrf.mxu0
        %v1013 = vadd.f32 %v821, %v1012
        %v1014 = vpop.f32.mrf.mxu0
        %v1015 = vadd.f32 %v825, %v1014
        %1016 = vmatprep.mubr.f32.mxu0 %v677
        %1017 = vmatmul.mubr.f32.gmra.mxu0 %v676
        %v1018 = vpop.f32.mrf.mxu0
        %v1019 = vadd.f32 %v821, %v1018
        %v1020 = vpop.f32.mrf.mxu0
        %v1021 = vadd.f32 %v825, %v1020
        %1022 = vmatprep.mubr.f32.mxu0 %v679
        %1023 = vmatmul.mubr.f32.gmra.mxu0 %v678
        %v1024 = vpop.f32.mrf.mxu0
        %v1025 = vadd.f32 %v821, %v1024
        %v1026 = vpop.f32.mrf.mxu0
        %v1027 = vadd.f32 %v825, %v1026
        %1028 = vmatprep.mubr.f32.mxu0 %v681
        %1029 = vmatmul.mubr.f32.gmra.mxu0 %v680
        %v1030 = vpop.f32.mrf.mxu0
        %v1031 = vadd.f32 %v821, %v1030
        %v1032 = vpop.f32.mrf.mxu0
        %v1033 = vadd.f32 %v825, %v1032
        %1034 = vmatprep.mubr.f32.mxu0 %v683
        %1035 = vmatmul.mubr.f32.gmra.mxu0 %v682
        %v1036 = vpop.f32.mrf.mxu0
        %v1037 = vadd.f32 %v821, %v1036
        %v1038 = vpop.f32.mrf.mxu0
        %v1039 = vadd.f32 %v825, %v1038
        %1040 = vmatprep.mubr.f32.mxu0 %v685
        %1041 = vmatmul.mubr.f32.gmra.mxu0 %v684
        %v1042 = vpop.f32.mrf.mxu0
        %v1043 = vadd.f32 %v821, %v1042
        %v1044 = vpop.f32.mrf.mxu0
        %v1045 = vadd.f32 %v825, %v1044
        %1046 = vmatprep.mubr.f32.mxu0 %v687
        %1047 = vmatmul.mubr.f32.gmra.mxu0 %v686
        %v1048 = vpop.f32.mrf.mxu0
        %v1049 = vadd.f32 %v821, %v1048
        %v1050 = vpop.f32.mrf.mxu0
        %v1051 = vadd.f32 %v825, %v1050
        %1052 = vdwg.mxu0
        %1053 = vmatprep.subr.mxu0 %v751
        %1054 = vmatpush1.msra.mxu0 %v750
        %1055 = vmatprep.subr.mxu0 %v747
        %1056 = vmatpush1.msra.mxu0 %v746
        %1057 = vmatprep.subr.mxu0 %v743
        %1058 = vmatpush1.msra.mxu0 %v742
        %1059 = vmatprep.subr.mxu0 %v739
        %1060 = vmatpush1.msra.mxu0 %v738
        %1061 = vmatprep.subr.mxu0 %v735
        %1062 = vmatpush1.msra.mxu0 %v734
        %1063 = vmatprep.subr.mxu0 %v731
        %1064 = vmatpush1.msra.mxu0 %v730
        %1065 = vmatprep.subr.mxu0 %v727
        %1066 = vmatpush1.msra.mxu0 %v726
        %1067 = vmatprep.subr.mxu0 %v723
        %1068 = vmatpush1.msra.mxu0 %v722
        %1069 = vmatprep.subr.mxu0 %v719
        %1070 = vmatpush1.msra.mxu0 %v718
        %1071 = vmatprep.subr.mxu0 %v715
        %1072 = vmatpush1.msra.mxu0 %v714
        %1073 = vmatprep.subr.mxu0 %v711
        %1074 = vmatpush1.msra.mxu0 %v710
        %1075 = vmatprep.subr.mxu0 %v707
        %1076 = vmatpush1.msra.mxu0 %v706
        %1077 = vmatprep.subr.mxu0 %v703
        %1078 = vmatpush1.msra.mxu0 %v702
        %1079 = vmatprep.subr.mxu0 %v699
        %1080 = vmatpush1.msra.mxu0 %v698
        %1081 = vmatprep.subr.mxu0 %v695
        %1082 = vmatpush1.msra.mxu0 %v694
        %1083 = vmatprep.subr.mxu0 %v691
        %1084 = vmatpush1.msra.mxu0 %v690
        %1085 = vmatprep.subr.mxu0 %v815
        %1086 = vmatpush2.msra.mxu0 %v814
        %1087 = vmatprep.subr.mxu0 %v811
        %1088 = vmatpush2.msra.mxu0 %v810
        %1089 = vmatprep.subr.mxu0 %v807
        %1090 = vmatpush2.msra.mxu0 %v806
        %1091 = vmatprep.subr.mxu0 %v803
        %1092 = vmatpush2.msra.mxu0 %v802
        %1093 = vmatprep.subr.mxu0 %v799
        %1094 = vmatpush2.msra.mxu0 %v798
        %1095 = vmatprep.subr.mxu0 %v795
        %1096 = vmatpush2.msra.mxu0 %v794
        %1097 = vmatprep.subr.mxu0 %v791
        %1098 = vmatpush2.msra.mxu0 %v790
        %1099 = vmatprep.subr.mxu0 %v787
        %1100 = vmatpush2.msra.mxu0 %v786
        %1101 = vmatprep.subr.mxu0 %v783
        %1102 = vmatpush2.msra.mxu0 %v782
        %1103 = vmatprep.subr.mxu0 %v779
        %1104 = vmatpush2.msra.mxu0 %v778
        %1105 = vmatprep.subr.mxu0 %v775
        %1106 = vmatpush2.msra.mxu0 %v774
        %1107 = vmatprep.subr.mxu0 %v771
        %1108 = vmatpush2.msra.mxu0 %v770
        %1109 = vmatprep.subr.mxu0 %v767
        %1110 = vmatpush2.msra.mxu0 %v766
        %1111 = vmatprep.subr.mxu0 %v763
        %1112 = vmatpush2.msra.mxu0 %v762
        %1113 = vmatprep.subr.mxu0 %v759
        %1114 = vmatpush2.msra.mxu0 %v758
        %1115 = vmatprep.subr.mxu0 %v755
        %1116 = vmatpush2.msra.mxu0 %v754
        %1117 = vmatprep.mubr.f32.mxu0 %v639
        %1118 = vmatmul.mubr.f32.gmra.mxu0 %v638
        %v1119 = vpop.f32.mrf.mxu0
        %v1120 = vadd.f32 %v829, %v1119
        %v1121 = vpop.f32.mrf.mxu0
        %v1122 = vadd.f32 %v833, %v1121
        %1123 = vmatprep.mubr.f32.mxu0 %v641
        %1124 = vmatmul.mubr.f32.gmra.mxu0 %v640
        %v1125 = vpop.f32.mrf.mxu0
        %v1126 = vadd.f32 %v829, %v1125
        %v1127 = vpop.f32.mrf.mxu0
        %v1128 = vadd.f32 %v833, %v1127
        %1129 = vmatprep.mubr.f32.mxu0 %v643
        %1130 = vmatmul.mubr.f32.gmra.mxu0 %v642
        %v1131 = vpop.f32.mrf.mxu0
        %v1132 = vadd.f32 %v829, %v1131
        %v1133 = vpop.f32.mrf.mxu0
        %v1134 = vadd.f32 %v833, %v1133
        %1135 = vmatprep.mubr.f32.mxu0 %v645
        %1136 = vmatmul.mubr.f32.gmra.mxu0 %v644
        %v1137 = vpop.f32.mrf.mxu0
        %v1138 = vadd.f32 %v829, %v1137
        %v1139 = vpop.f32.mrf.mxu0
        %v1140 = vadd.f32 %v833, %v1139
        %1141 = vmatprep.mubr.f32.mxu0 %v647
        %1142 = vmatmul.mubr.f32.gmra.mxu0 %v646
        %v1143 = vpop.f32.mrf.mxu0
        %v1144 = vadd.f32 %v829, %v1143
        %v1145 = vpop.f32.mrf.mxu0
        %v1146 = vadd.f32 %v833, %v1145
        %1147 = vmatprep.mubr.f32.mxu0 %v649
        %1148 = vmatmul.mubr.f32.gmra.mxu0 %v648
        %v1149 = vpop.f32.mrf.mxu0
        %v1150 = vadd.f32 %v829, %v1149
        %v1151 = vpop.f32.mrf.mxu0
        %v1152 = vadd.f32 %v833, %v1151
        %1153 = vmatprep.mubr.f32.mxu0 %v651
        %1154 = vmatmul.mubr.f32.gmra.mxu0 %v650
        %v1155 = vpop.f32.mrf.mxu0
        %v1156 = vadd.f32 %v829, %v1155
        %v1157 = vpop.f32.mrf.mxu0
        %v1158 = vadd.f32 %v833, %v1157
        %1159 = vmatprep.mubr.f32.mxu0 %v653
        %1160 = vmatmul.mubr.f32.gmra.mxu0 %v652
        %v1161 = vpop.f32.mrf.mxu0
        %v1162 = vadd.f32 %v829, %v1161
        %v1163 = vpop.f32.mrf.mxu0
        %v1164 = vadd.f32 %v833, %v1163
        %1165 = vmatprep.mubr.f32.mxu0 %v655
        %1166 = vmatmul.mubr.f32.gmra.mxu0 %v654
        %v1167 = vpop.f32.mrf.mxu0
        %v1168 = vadd.f32 %v829, %v1167
        %v1169 = vpop.f32.mrf.mxu0
        %v1170 = vadd.f32 %v833, %v1169
        %1171 = vmatprep.mubr.f32.mxu0 %v657
        %1172 = vmatmul.mubr.f32.gmra.mxu0 %v656
        %v1173 = vpop.f32.mrf.mxu0
        %v1174 = vadd.f32 %v829, %v1173
        %v1175 = vpop.f32.mrf.mxu0
        %v1176 = vadd.f32 %v833, %v1175
        %1177 = vmatprep.mubr.f32.mxu0 %v659
        %1178 = vmatmul.mubr.f32.gmra.mxu0 %v658
        %v1179 = vpop.f32.mrf.mxu0
        %v1180 = vadd.f32 %v829, %v1179
        %v1181 = vpop.f32.mrf.mxu0
        %v1182 = vadd.f32 %v833, %v1181
        %1183 = vmatprep.mubr.f32.mxu0 %v661
        %1184 = vmatmul.mubr.f32.gmra.mxu0 %v660
        %v1185 = vpop.f32.mrf.mxu0
        %v1186 = vadd.f32 %v829, %v1185
        %v1187 = vpop.f32.mrf.mxu0
        %v1188 = vadd.f32 %v833, %v1187
        %1189 = vmatprep.mubr.f32.mxu0 %v663
        %1190 = vmatmul.mubr.f32.gmra.mxu0 %v662
        %v1191 = vpop.f32.mrf.mxu0
        %v1192 = vadd.f32 %v829, %v1191
        %v1193 = vpop.f32.mrf.mxu0
        %v1194 = vadd.f32 %v833, %v1193
        %1195 = vmatprep.mubr.f32.mxu0 %v665
        %1196 = vmatmul.mubr.f32.gmra.mxu0 %v664
        %v1197 = vpop.f32.mrf.mxu0
        %v1198 = vadd.f32 %v829, %v1197
        %v1199 = vpop.f32.mrf.mxu0
        %v1200 = vadd.f32 %v833, %v1199
        %1201 = vmatprep.mubr.f32.mxu0 %v667
        %1202 = vmatmul.mubr.f32.gmra.mxu0 %v666
        %v1203 = vpop.f32.mrf.mxu0
        %v1204 = vadd.f32 %v829, %v1203
        %v1205 = vpop.f32.mrf.mxu0
        %v1206 = vadd.f32 %v833, %v1205
        %1207 = vmatprep.mubr.f32.mxu0 %v669
        %1208 = vmatmul.mubr.f32.gmra.mxu0 %v668
        %v1209 = vpop.f32.mrf.mxu0
        %v1210 = vadd.f32 %v829, %v1209
        %v1211 = vpop.f32.mrf.mxu0
        %v1212 = vadd.f32 %v833, %v1211
        %1213 = vmatprep.mubr.f32.mxu0 %v671
        %1214 = vmatmul.mubr.f32.gmra.mxu0 %v670
        %v1215 = vpop.f32.mrf.mxu0
        %v1216 = vadd.f32 %v829, %v1215
        %v1217 = vpop.f32.mrf.mxu0
        %v1218 = vadd.f32 %v833, %v1217
        %1219 = vmatprep.mubr.f32.mxu0 %v673
        %1220 = vmatmul.mubr.f32.gmra.mxu0 %v672
        %v1221 = vpop.f32.mrf.mxu0
        %v1222 = vadd.f32 %v829, %v1221
        %v1223 = vpop.f32.mrf.mxu0
        %v1224 = vadd.f32 %v833, %v1223
        %1225 = vmatprep.mubr.f32.mxu0 %v675
        %1226 = vmatmul.mubr.f32.gmra.mxu0 %v674
        %v1227 = vpop.f32.mrf.mxu0
        %v1228 = vadd.f32 %v829, %v1227
        %v1229 = vpop.f32.mrf.mxu0
        %v1230 = vadd.f32 %v833, %v1229
        %1231 = vmatprep.mubr.f32.mxu0 %v677
        %1232 = vmatmul.mubr.f32.gmra.mxu0 %v676
        %v1233 = vpop.f32.mrf.mxu0
        %v1234 = vadd.f32 %v829, %v1233
        %v1235 = vpop.f32.mrf.mxu0
        %v1236 = vadd.f32 %v833, %v1235
        %1237 = vmatprep.mubr.f32.mxu0 %v679
        %1238 = vmatmul.mubr.f32.gmra.mxu0 %v678
        %v1239 = vpop.f32.mrf.mxu0
        %v1240 = vadd.f32 %v829, %v1239
        %v1241 = vpop.f32.mrf.mxu0
        %v1242 = vadd.f32 %v833, %v1241
        %1243 = vmatprep.mubr.f32.mxu0 %v681
        %1244 = vmatmul.mubr.f32.gmra.mxu0 %v680
        %v1245 = vpop.f32.mrf.mxu0
        %v1246 = vadd.f32 %v829, %v1245
        %v1247 = vpop.f32.mrf.mxu0
        %v1248 = vadd.f32 %v833, %v1247
        %1249 = vmatprep.mubr.f32.mxu0 %v683
        %1250 = vmatmul.mubr.f32.gmra.mxu0 %v682
        %v1251 = vpop.f32.mrf.mxu0
        %v1252 = vadd.f32 %v829, %v1251
        %v1253 = vpop.f32.mrf.mxu0
        %v1254 = vadd.f32 %v833, %v1253
        %1255 = vmatprep.mubr.f32.mxu0 %v685
        %1256 = vmatmul.mubr.f32.gmra.mxu0 %v684
        %v1257 = vpop.f32.mrf.mxu0
        %v1258 = vadd.f32 %v829, %v1257
        %v1259 = vpop.f32.mrf.mxu0
        %v1260 = vadd.f32 %v833, %v1259
        %1261 = vmatprep.mubr.f32.mxu0 %v687
        %1262 = vmatmul.mubr.f32.gmra.mxu0 %v686
        %v1263 = vpop.f32.mrf.mxu0
        %v1264 = vadd.f32 %v829, %v1263
        %v1265 = vpop.f32.mrf.mxu0
        %v1266 = vadd.f32 %v833, %v1265
        %1267 = vdwg.mxu0
        %v1268 = vmul.f32 %v905, 0.5
        %v1269 = vmul.f32 %v907, 0.5
        %v1270 = vmul.f32 %v1120, 0.5
        %v1271 = vmul.f32 %v1122, 0.5
        %v1272 = vmul.f32 %v911, 0.5
        %v1273 = vmul.f32 %v913, 0.5
        %v1274 = vmul.f32 %v1126, 0.5
        %v1275 = vmul.f32 %v1128, 0.5
        %v1276 = vmul.f32 %v917, 0.5
        %v1277 = vmul.f32 %v919, 0.5
        %v1278 = vmul.f32 %v1132, 0.5
        %v1279 = vmul.f32 %v1134, 0.5
        %v1280 = vmul.f32 %v923, 0.5
        %v1281 = vmul.f32 %v925, 0.5
        %v1282 = vmul.f32 %v1138, 0.5
        %v1283 = vmul.f32 %v1140, 0.5
        %v1284 = vmul.f32 %v929, 0.5
        %v1285 = vmul.f32 %v931, 0.5
        %v1286 = vmul.f32 %v1144, 0.5
        %v1287 = vmul.f32 %v1146, 0.5
        %v1288 = vmul.f32 %v935, 0.5
        %v1289 = vmul.f32 %v937, 0.5
        %v1290 = vmul.f32 %v1150, 0.5
        %v1291 = vmul.f32 %v1152, 0.5
        %v1292 = vmul.f32 %v941, 0.5
        %v1293 = vmul.f32 %v943, 0.5
        %v1294 = vmul.f32 %v1156, 0.5
        %v1295 = vmul.f32 %v1158, 0.5
        %v1296 = vmul.f32 %v947, 0.5
        %v1297 = vmul.f32 %v949, 0.5
        %v1298 = vmul.f32 %v1162, 0.5
        %v1299 = vmul.f32 %v1164, 0.5
        %v1300 = vmul.f32 %v953, 0.5
        %v1301 = vmul.f32 %v955, 0.5
        %v1302 = vmul.f32 %v1168, 0.5
        %v1303 = vmul.f32 %v1170, 0.5
        %v1304 = vmul.f32 %v959, 0.5
        %v1305 = vmul.f32 %v961, 0.5
        %v1306 = vmul.f32 %v1174, 0.5
        %v1307 = vmul.f32 %v1176, 0.5
        %v1308 = vmul.f32 %v965, 0.5
        %v1309 = vmul.f32 %v967, 0.5
        %v1310 = vmul.f32 %v1180, 0.5
        %v1311 = vmul.f32 %v1182, 0.5
        %v1312 = vmul.f32 %v971, 0.5
        %v1313 = vmul.f32 %v973, 0.5
        %v1314 = vmul.f32 %v1186, 0.5
        %v1315 = vmul.f32 %v1188, 0.5
        %v1316 = vmul.f32 %v977, 0.5
        %v1317 = vmul.f32 %v979, 0.5
        %v1318 = vmul.f32 %v1192, 0.5
        %v1319 = vmul.f32 %v1194, 0.5
        %v1320 = vmul.f32 %v983, 0.5
        %v1321 = vmul.f32 %v985, 0.5
        %v1322 = vmul.f32 %v1198, 0.5
        %v1323 = vmul.f32 %v1200, 0.5
        %v1324 = vmul.f32 %v989, 0.5
        %v1325 = vmul.f32 %v991, 0.5
        %v1326 = vmul.f32 %v1204, 0.5
        %v1327 = vmul.f32 %v1206, 0.5
        %v1328 = vmul.f32 %v995, 0.5
        %v1329 = vmul.f32 %v997, 0.5
        %v1330 = vmul.f32 %v1210, 0.5
        %v1331 = vmul.f32 %v1212, 0.5
        %v1332 = vmul.f32 %v1001, 0.5
        %v1333 = vmul.f32 %v1003, 0.5
        %v1334 = vmul.f32 %v1216, 0.5
        %v1335 = vmul.f32 %v1218, 0.5
        %v1336 = vmul.f32 %v1007, 0.5
        %v1337 = vmul.f32 %v1009, 0.5
        %v1338 = vmul.f32 %v1222, 0.5
        %v1339 = vmul.f32 %v1224, 0.5
        %v1340 = vmul.f32 %v1013, 0.5
        %v1341 = vmul.f32 %v1015, 0.5
        %v1342 = vmul.f32 %v1228, 0.5
        %v1343 = vmul.f32 %v1230, 0.5
        %v1344 = vmul.f32 %v1019, 0.5
        %v1345 = vmul.f32 %v1021, 0.5
        %v1346 = vmul.f32 %v1234, 0.5
        %v1347 = vmul.f32 %v1236, 0.5
        %v1348 = vmul.f32 %v1025, 0.5
        %v1349 = vmul.f32 %v1027, 0.5
        %v1350 = vmul.f32 %v1240, 0.5
        %v1351 = vmul.f32 %v1242, 0.5
        %v1352 = vmul.f32 %v1031, 0.5
        %v1353 = vmul.f32 %v1033, 0.5
        %v1354 = vmul.f32 %v1246, 0.5
        %v1355 = vmul.f32 %v1248, 0.5
        %v1356 = vmul.f32 %v1037, 0.5
        %v1357 = vmul.f32 %v1039, 0.5
        %v1358 = vmul.f32 %v1252, 0.5
        %v1359 = vmul.f32 %v1254, 0.5
        %v1360 = vmul.f32 %v1043, 0.5
        %v1361 = vmul.f32 %v1045, 0.5
        %v1362 = vmul.f32 %v1258, 0.5
        %v1363 = vmul.f32 %v1260, 0.5
        %v1364 = vmul.f32 %v1049, 0.5
        %v1365 = vmul.f32 %v1051, 0.5
        %v1366 = vmul.f32 %v1264, 0.5
        %v1367 = vmul.f32 %v1266, 0.5
        %v1368 = vmul.f32 %v905, 0.70710677
        %v1369 = vmul.f32 %v907, 0.70710677
        %v1370 = vmul.f32 %v1120, 0.70710677
        %v1371 = vmul.f32 %v1122, 0.70710677
        %v1372 = vmul.f32 %v911, 0.70710677
        %v1373 = vmul.f32 %v913, 0.70710677
        %v1374 = vmul.f32 %v1126, 0.70710677
        %v1375 = vmul.f32 %v1128, 0.70710677
        %v1376 = vmul.f32 %v917, 0.70710677
        %v1377 = vmul.f32 %v919, 0.70710677
        %v1378 = vmul.f32 %v1132, 0.70710677
        %v1379 = vmul.f32 %v1134, 0.70710677
        %v1380 = vmul.f32 %v923, 0.70710677
        %v1381 = vmul.f32 %v925, 0.70710677
        %v1382 = vmul.f32 %v1138, 0.70710677
        %v1383 = vmul.f32 %v1140, 0.70710677
        %v1384 = vmul.f32 %v929, 0.70710677
        %v1385 = vmul.f32 %v931, 0.70710677
        %v1386 = vmul.f32 %v1144, 0.70710677
        %v1387 = vmul.f32 %v1146, 0.70710677
        %v1388 = vmul.f32 %v935, 0.70710677
        %v1389 = vmul.f32 %v937, 0.70710677
        %v1390 = vmul.f32 %v1150, 0.70710677
        %v1391 = vmul.f32 %v1152, 0.70710677
        %v1392 = vmul.f32 %v941, 0.70710677
        %v1393 = vmul.f32 %v943, 0.70710677
        %v1394 = vmul.f32 %v1156, 0.70710677
        %v1395 = vmul.f32 %v1158, 0.70710677
        %v1396 = vmul.f32 %v947, 0.70710677
        %v1397 = vmul.f32 %v949, 0.70710677
        %v1398 = vmul.f32 %v1162, 0.70710677
        %v1399 = vmul.f32 %v1164, 0.70710677
        %v1400 = vmul.f32 %v953, 0.70710677
        %v1401 = vmul.f32 %v955, 0.70710677
        %v1402 = vmul.f32 %v1168, 0.70710677
        %v1403 = vmul.f32 %v1170, 0.70710677
        %v1404 = vmul.f32 %v959, 0.70710677
        %v1405 = vmul.f32 %v961, 0.70710677
        %v1406 = vmul.f32 %v1174, 0.70710677
        %v1407 = vmul.f32 %v1176, 0.70710677
        %v1408 = vmul.f32 %v965, 0.70710677
        %v1409 = vmul.f32 %v967, 0.70710677
        %v1410 = vmul.f32 %v1180, 0.70710677
        %v1411 = vmul.f32 %v1182, 0.70710677
        %v1412 = vmul.f32 %v971, 0.70710677
        %v1413 = vmul.f32 %v973, 0.70710677
        %v1414 = vmul.f32 %v1186, 0.70710677
        %v1415 = vmul.f32 %v1188, 0.70710677
        %v1416 = vmul.f32 %v977, 0.70710677
        %v1417 = vmul.f32 %v979, 0.70710677
        %v1418 = vmul.f32 %v1192, 0.70710677
        %v1419 = vmul.f32 %v1194, 0.70710677
        %v1420 = vmul.f32 %v983, 0.70710677
        %v1421 = vmul.f32 %v985, 0.70710677
        %v1422 = vmul.f32 %v1198, 0.70710677
        %v1423 = vmul.f32 %v1200, 0.70710677
        %v1424 = vmul.f32 %v989, 0.70710677
        %v1425 = vmul.f32 %v991, 0.70710677
        %v1426 = vmul.f32 %v1204, 0.70710677
        %v1427 = vmul.f32 %v1206, 0.70710677
        %v1428 = vmul.f32 %v995, 0.70710677
        %v1429 = vmul.f32 %v997, 0.70710677
        %v1430 = vmul.f32 %v1210, 0.70710677
        %v1431 = vmul.f32 %v1212, 0.70710677
        %v1432 = vmul.f32 %v1001, 0.70710677
        %v1433 = vmul.f32 %v1003, 0.70710677
        %v1434 = vmul.f32 %v1216, 0.70710677
        %v1435 = vmul.f32 %v1218, 0.70710677
        %v1436 = vmul.f32 %v1007, 0.70710677
        %v1437 = vmul.f32 %v1009, 0.70710677
        %v1438 = vmul.f32 %v1222, 0.70710677
        %v1439 = vmul.f32 %v1224, 0.70710677
        %v1440 = vmul.f32 %v1013, 0.70710677
        %v1441 = vmul.f32 %v1015, 0.70710677
        %v1442 = vmul.f32 %v1228, 0.70710677
        %v1443 = vmul.f32 %v1230, 0.70710677
        %v1444 = vmul.f32 %v1019, 0.70710677
        %v1445 = vmul.f32 %v1021, 0.70710677
        %v1446 = vmul.f32 %v1234, 0.70710677
        %v1447 = vmul.f32 %v1236, 0.70710677
        %v1448 = vmul.f32 %v1025, 0.70710677
        %v1449 = vmul.f32 %v1027, 0.70710677
        %v1450 = vmul.f32 %v1240, 0.70710677
        %v1451 = vmul.f32 %v1242, 0.70710677
        %v1452 = vmul.f32 %v1031, 0.70710677
        %v1453 = vmul.f32 %v1033, 0.70710677
        %v1454 = vmul.f32 %v1246, 0.70710677
        %v1455 = vmul.f32 %v1248, 0.70710677
        %v1456 = vmul.f32 %v1037, 0.70710677
        %v1457 = vmul.f32 %v1039, 0.70710677
        %v1458 = vmul.f32 %v1252, 0.70710677
        %v1459 = vmul.f32 %v1254, 0.70710677
        %v1460 = vmul.f32 %v1043, 0.70710677
        %v1461 = vmul.f32 %v1045, 0.70710677
        %v1462 = vmul.f32 %v1258, 0.70710677
        %v1463 = vmul.f32 %v1260, 0.70710677
        %v1464 = vmul.f32 %v1049, 0.70710677
        %v1465 = vmul.f32 %v1051, 0.70710677
        %v1466 = vmul.f32 %v1264, 0.70710677
        %v1467 = vmul.f32 %v1266, 0.70710677
        %v1468 = verf.f32.pop %v1368
        %v1469 = verf.f32.pop %v1369
        %v1470 = verf.f32.pop %v1370
        %v1471 = verf.f32.pop %v1371
        %v1472 = verf.f32.pop %v1372
        %v1473 = verf.f32.pop %v1373
        %v1474 = verf.f32.pop %v1374
        %v1475 = verf.f32.pop %v1375
        %v1476 = verf.f32.pop %v1376
        %v1477 = verf.f32.pop %v1377
        %v1478 = verf.f32.pop %v1378
        %v1479 = verf.f32.pop %v1379
        %v1480 = verf.f32.pop %v1380
        %v1481 = verf.f32.pop %v1381
        %v1482 = verf.f32.pop %v1382
        %v1483 = verf.f32.pop %v1383
        %v1484 = verf.f32.pop %v1384
        %v1485 = verf.f32.pop %v1385
        %v1486 = verf.f32.pop %v1386
        %v1487 = verf.f32.pop %v1387
        %v1488 = verf.f32.pop %v1388
        %v1489 = verf.f32.pop %v1389
        %v1490 = verf.f32.pop %v1390
        %v1491 = verf.f32.pop %v1391
        %v1492 = verf.f32.pop %v1392
        %v1493 = verf.f32.pop %v1393
        %v1494 = verf.f32.pop %v1394
        %v1495 = verf.f32.pop %v1395
        %v1496 = verf.f32.pop %v1396
        %v1497 = verf.f32.pop %v1397
        %v1498 = verf.f32.pop %v1398
        %v1499 = verf.f32.pop %v1399
        %v1500 = verf.f32.pop %v1400
        %v1501 = verf.f32.pop %v1401
        %v1502 = verf.f32.pop %v1402
        %v1503 = verf.f32.pop %v1403
        %v1504 = verf.f32.pop %v1404
        %v1505 = verf.f32.pop %v1405
        %v1506 = verf.f32.pop %v1406
        %v1507 = verf.f32.pop %v1407
        %v1508 = verf.f32.pop %v1408
        %v1509 = verf.f32.pop %v1409
        %v1510 = verf.f32.pop %v1410
        %v1511 = verf.f32.pop %v1411
        %v1512 = verf.f32.pop %v1412
        %v1513 = verf.f32.pop %v1413
        %v1514 = verf.f32.pop %v1414
        %v1515 = verf.f32.pop %v1415
        %v1516 = verf.f32.pop %v1416
        %v1517 = verf.f32.pop %v1417
        %v1518 = verf.f32.pop %v1418
        %v1519 = verf.f32.pop %v1419
        %v1520 = verf.f32.pop %v1420
        %v1521 = verf.f32.pop %v1421
        %v1522 = verf.f32.pop %v1422
        %v1523 = verf.f32.pop %v1423
        %v1524 = verf.f32.pop %v1424
        %v1525 = verf.f32.pop %v1425
        %v1526 = verf.f32.pop %v1426
        %v1527 = verf.f32.pop %v1427
        %v1528 = verf.f32.pop %v1428
        %v1529 = verf.f32.pop %v1429
        %v1530 = verf.f32.pop %v1430
        %v1531 = verf.f32.pop %v1431
        %v1532 = verf.f32.pop %v1432
        %v1533 = verf.f32.pop %v1433
        %v1534 = verf.f32.pop %v1434
        %v1535 = verf.f32.pop %v1435
        %v1536 = verf.f32.pop %v1436
        %v1537 = verf.f32.pop %v1437
        %v1538 = verf.f32.pop %v1438
        %v1539 = verf.f32.pop %v1439
        %v1540 = verf.f32.pop %v1440
        %v1541 = verf.f32.pop %v1441
        %v1542 = verf.f32.pop %v1442
        %v1543 = verf.f32.pop %v1443
        %v1544 = verf.f32.pop %v1444
        %v1545 = verf.f32.pop %v1445
        %v1546 = verf.f32.pop %v1446
        %v1547 = verf.f32.pop %v1447
        %v1548 = verf.f32.pop %v1448
        %v1549 = verf.f32.pop %v1449
        %v1550 = verf.f32.pop %v1450
        %v1551 = verf.f32.pop %v1451
        %v1552 = verf.f32.pop %v1452
        %v1553 = verf.f32.pop %v1453
        %v1554 = verf.f32.pop %v1454
        %v1555 = verf.f32.pop %v1455
        %v1556 = verf.f32.pop %v1456
        %v1557 = verf.f32.pop %v1457
        %v1558 = verf.f32.pop %v1458
        %v1559 = verf.f32.pop %v1459
        %v1560 = verf.f32.pop %v1460
        %v1561 = verf.f32.pop %v1461
        %v1562 = verf.f32.pop %v1462
        %v1563 = verf.f32.pop %v1463
        %v1564 = verf.f32.pop %v1464
        %v1565 = verf.f32.pop %v1465
        %v1566 = verf.f32.pop %v1466
        %v1567 = verf.f32.pop %v1467
        %v1568 = vadd.f32 %v1468, 1.0
        %v1569 = vadd.f32 %v1469, 1.0
        %v1570 = vadd.f32 %v1470, 1.0
        %v1571 = vadd.f32 %v1471, 1.0
        %v1572 = vadd.f32 %v1472, 1.0
        %v1573 = vadd.f32 %v1473, 1.0
        %v1574 = vadd.f32 %v1474, 1.0
        %v1575 = vadd.f32 %v1475, 1.0
        %v1576 = vadd.f32 %v1476, 1.0
        %v1577 = vadd.f32 %v1477, 1.0
        %v1578 = vadd.f32 %v1478, 1.0
        %v1579 = vadd.f32 %v1479, 1.0
        %v1580 = vadd.f32 %v1480, 1.0
        %v1581 = vadd.f32 %v1481, 1.0
        %v1582 = vadd.f32 %v1482, 1.0
        %v1583 = vadd.f32 %v1483, 1.0
        %v1584 = vadd.f32 %v1484, 1.0
        %v1585 = vadd.f32 %v1485, 1.0
        %v1586 = vadd.f32 %v1486, 1.0
        %v1587 = vadd.f32 %v1487, 1.0
        %v1588 = vadd.f32 %v1488, 1.0
        %v1589 = vadd.f32 %v1489, 1.0
        %v1590 = vadd.f32 %v1490, 1.0
        %v1591 = vadd.f32 %v1491, 1.0
        %v1592 = vadd.f32 %v1492, 1.0
        %v1593 = vadd.f32 %v1493, 1.0
        %v1594 = vadd.f32 %v1494, 1.0
        %v1595 = vadd.f32 %v1495, 1.0
        %v1596 = vadd.f32 %v1496, 1.0
        %v1597 = vadd.f32 %v1497, 1.0
        %v1598 = vadd.f32 %v1498, 1.0
        %v1599 = vadd.f32 %v1499, 1.0
        %v1600 = vadd.f32 %v1500, 1.0
        %v1601 = vadd.f32 %v1501, 1.0
        %v1602 = vadd.f32 %v1502, 1.0
        %v1603 = vadd.f32 %v1503, 1.0
        %v1604 = vadd.f32 %v1504, 1.0
        %v1605 = vadd.f32 %v1505, 1.0
        %v1606 = vadd.f32 %v1506, 1.0
        %v1607 = vadd.f32 %v1507, 1.0
        %v1608 = vadd.f32 %v1508, 1.0
        %v1609 = vadd.f32 %v1509, 1.0
        %v1610 = vadd.f32 %v1510, 1.0
        %v1611 = vadd.f32 %v1511, 1.0
        %v1612 = vadd.f32 %v1512, 1.0
        %v1613 = vadd.f32 %v1513, 1.0
        %v1614 = vadd.f32 %v1514, 1.0
        %v1615 = vadd.f32 %v1515, 1.0
        %v1616 = vadd.f32 %v1516, 1.0
        %v1617 = vadd.f32 %v1517, 1.0
        %v1618 = vadd.f32 %v1518, 1.0
        %v1619 = vadd.f32 %v1519, 1.0
        %v1620 = vadd.f32 %v1520, 1.0
        %v1621 = vadd.f32 %v1521, 1.0
        %v1622 = vadd.f32 %v1522, 1.0
        %v1623 = vadd.f32 %v1523, 1.0
        %v1624 = vadd.f32 %v1524, 1.0
        %v1625 = vadd.f32 %v1525, 1.0
        %v1626 = vadd.f32 %v1526, 1.0
        %v1627 = vadd.f32 %v1527, 1.0
        %v1628 = vadd.f32 %v1528, 1.0
        %v1629 = vadd.f32 %v1529, 1.0
        %v1630 = vadd.f32 %v1530, 1.0
        %v1631 = vadd.f32 %v1531, 1.0
        %v1632 = vadd.f32 %v1532, 1.0
        %v1633 = vadd.f32 %v1533, 1.0
        %v1634 = vadd.f32 %v1534, 1.0
        %v1635 = vadd.f32 %v1535, 1.0
        %v1636 = vadd.f32 %v1536, 1.0
        %v1637 = vadd.f32 %v1537, 1.0
        %v1638 = vadd.f32 %v1538, 1.0
        %v1639 = vadd.f32 %v1539, 1.0
        %v1640 = vadd.f32 %v1540, 1.0
        %v1641 = vadd.f32 %v1541, 1.0
        %v1642 = vadd.f32 %v1542, 1.0
        %v1643 = vadd.f32 %v1543, 1.0
        %v1644 = vadd.f32 %v1544, 1.0
        %v1645 = vadd.f32 %v1545, 1.0
        %v1646 = vadd.f32 %v1546, 1.0
        %v1647 = vadd.f32 %v1547, 1.0
        %v1648 = vadd.f32 %v1548, 1.0
        %v1649 = vadd.f32 %v1549, 1.0
        %v1650 = vadd.f32 %v1550, 1.0
        %v1651 = vadd.f32 %v1551, 1.0
        %v1652 = vadd.f32 %v1552, 1.0
        %v1653 = vadd.f32 %v1553, 1.0
        %v1654 = vadd.f32 %v1554, 1.0
        %v1655 = vadd.f32 %v1555, 1.0
        %v1656 = vadd.f32 %v1556, 1.0
        %v1657 = vadd.f32 %v1557, 1.0
        %v1658 = vadd.f32 %v1558, 1.0
        %v1659 = vadd.f32 %v1559, 1.0
        %v1660 = vadd.f32 %v1560, 1.0
        %v1661 = vadd.f32 %v1561, 1.0
        %v1662 = vadd.f32 %v1562, 1.0
        %v1663 = vadd.f32 %v1563, 1.0
        %v1664 = vadd.f32 %v1564, 1.0
        %v1665 = vadd.f32 %v1565, 1.0
        %v1666 = vadd.f32 %v1566, 1.0
        %v1667 = vadd.f32 %v1567, 1.0
        %v1668 = vmul.f32 %v1268, %v1568
        %v1669 = vmul.f32 %v1269, %v1569
        %v1670 = vmul.f32 %v1270, %v1570
        %v1671 = vmul.f32 %v1271, %v1571
        %v1672 = vmul.f32 %v1272, %v1572
        %v1673 = vmul.f32 %v1273, %v1573
        %v1674 = vmul.f32 %v1274, %v1574
        %v1675 = vmul.f32 %v1275, %v1575
        %v1676 = vmul.f32 %v1276, %v1576
        %v1677 = vmul.f32 %v1277, %v1577
        %v1678 = vmul.f32 %v1278, %v1578
        %v1679 = vmul.f32 %v1279, %v1579
        %v1680 = vmul.f32 %v1280, %v1580
        %v1681 = vmul.f32 %v1281, %v1581
        %v1682 = vmul.f32 %v1282, %v1582
        %v1683 = vmul.f32 %v1283, %v1583
        %v1684 = vmul.f32 %v1284, %v1584
        %v1685 = vmul.f32 %v1285, %v1585
        %v1686 = vmul.f32 %v1286, %v1586
        %v1687 = vmul.f32 %v1287, %v1587
        %v1688 = vmul.f32 %v1288, %v1588
        %v1689 = vmul.f32 %v1289, %v1589
        %v1690 = vmul.f32 %v1290, %v1590
        %v1691 = vmul.f32 %v1291, %v1591
        %v1692 = vmul.f32 %v1292, %v1592
        %v1693 = vmul.f32 %v1293, %v1593
        %v1694 = vmul.f32 %v1294, %v1594
        %v1695 = vmul.f32 %v1295, %v1595
        %v1696 = vmul.f32 %v1296, %v1596
        %v1697 = vmul.f32 %v1297, %v1597
        %v1698 = vmul.f32 %v1298, %v1598
        %v1699 = vmul.f32 %v1299, %v1599
        %v1700 = vmul.f32 %v1300, %v1600
        %v1701 = vmul.f32 %v1301, %v1601
        %v1702 = vmul.f32 %v1302, %v1602
        %v1703 = vmul.f32 %v1303, %v1603
        %v1704 = vmul.f32 %v1304, %v1604
        %v1705 = vmul.f32 %v1305, %v1605
        %v1706 = vmul.f32 %v1306, %v1606
        %v1707 = vmul.f32 %v1307, %v1607
        %v1708 = vmul.f32 %v1308, %v1608
        %v1709 = vmul.f32 %v1309, %v1609
        %v1710 = vmul.f32 %v1310, %v1610
        %v1711 = vmul.f32 %v1311, %v1611
        %v1712 = vmul.f32 %v1312, %v1612
        %v1713 = vmul.f32 %v1313, %v1613
        %v1714 = vmul.f32 %v1314, %v1614
        %v1715 = vmul.f32 %v1315, %v1615
        %v1716 = vmul.f32 %v1316, %v1616
        %v1717 = vmul.f32 %v1317, %v1617
        %v1718 = vmul.f32 %v1318, %v1618
        %v1719 = vmul.f32 %v1319, %v1619
        %v1720 = vmul.f32 %v1320, %v1620
        %v1721 = vmul.f32 %v1321, %v1621
        %v1722 = vmul.f32 %v1322, %v1622
        %v1723 = vmul.f32 %v1323, %v1623
        %v1724 = vmul.f32 %v1324, %v1624
        %v1725 = vmul.f32 %v1325, %v1625
        %v1726 = vmul.f32 %v1326, %v1626
        %v1727 = vmul.f32 %v1327, %v1627
        %v1728 = vmul.f32 %v1328, %v1628
        %v1729 = vmul.f32 %v1329, %v1629
        %v1730 = vmul.f32 %v1330, %v1630
        %v1731 = vmul.f32 %v1331, %v1631
        %v1732 = vmul.f32 %v1332, %v1632
        %v1733 = vmul.f32 %v1333, %v1633
        %v1734 = vmul.f32 %v1334, %v1634
        %v1735 = vmul.f32 %v1335, %v1635
        %v1736 = vmul.f32 %v1336, %v1636
        %v1737 = vmul.f32 %v1337, %v1637
        %v1738 = vmul.f32 %v1338, %v1638
        %v1739 = vmul.f32 %v1339, %v1639
        %v1740 = vmul.f32 %v1340, %v1640
        %v1741 = vmul.f32 %v1341, %v1641
        %v1742 = vmul.f32 %v1342, %v1642
        %v1743 = vmul.f32 %v1343, %v1643
        %v1744 = vmul.f32 %v1344, %v1644
        %v1745 = vmul.f32 %v1345, %v1645
        %v1746 = vmul.f32 %v1346, %v1646
        %v1747 = vmul.f32 %v1347, %v1647
        %v1748 = vmul.f32 %v1348, %v1648
        %v1749 = vmul.f32 %v1349, %v1649
        %v1750 = vmul.f32 %v1350, %v1650
        %v1751 = vmul.f32 %v1351, %v1651
        %v1752 = vmul.f32 %v1352, %v1652
        %v1753 = vmul.f32 %v1353, %v1653
        %v1754 = vmul.f32 %v1354, %v1654
        %v1755 = vmul.f32 %v1355, %v1655
        %v1756 = vmul.f32 %v1356, %v1656
        %v1757 = vmul.f32 %v1357, %v1657
        %v1758 = vmul.f32 %v1358, %v1658
        %v1759 = vmul.f32 %v1359, %v1659
        %v1760 = vmul.f32 %v1360, %v1660
        %v1761 = vmul.f32 %v1361, %v1661
        %v1762 = vmul.f32 %v1362, %v1662
        %v1763 = vmul.f32 %v1363, %v1663
        %v1764 = vmul.f32 %v1364, %v1664
        %v1765 = vmul.f32 %v1365, %v1665
        %v1766 = vmul.f32 %v1366, %v1666
        %v1767 = vmul.f32 %v1367, %v1667
        %v1768 = vld [vmem:[#allocation2] sm:$0xff]
        %v1769 = vld [vmem:[#allocation2 + $0x8] sm:$0xff]
        %v1770 = vld [vmem:[#allocation2 + $0x10] sm:$0xff]
        %v1771 = vld [vmem:[#allocation2 + $0x18] sm:$0xff]
        %v1772 = vld [vmem:[#allocation2 + $0x20] sm:$0xff]
        %v1773 = vld [vmem:[#allocation2 + $0x28] sm:$0xff]
        %v1774 = vld [vmem:[#allocation2 + $0x30] sm:$0xff]
        %v1775 = vld [vmem:[#allocation2 + $0x38] sm:$0xff]
        %v1776 = vld [vmem:[#allocation2 + $0x40] sm:$0xff]
        %v1777 = vld [vmem:[#allocation2 + $0x48] sm:$0xff]
        %v1778 = vld [vmem:[#allocation2 + $0x50] sm:$0xff]
        %v1779 = vld [vmem:[#allocation2 + $0x58] sm:$0xff]
        %v1780 = vld [vmem:[#allocation2 + $0x60] sm:$0xff]
        %v1781 = vld [vmem:[#allocation2 + $0x68] sm:$0xff]
        %v1782 = vld [vmem:[#allocation2 + $0x70] sm:$0xff]
        %v1783 = vld [vmem:[#allocation2 + $0x78] sm:$0xff]
        %v1784 = vld [vmem:[#allocation2 + $0x80] sm:$0xff]
        %v1785 = vld [vmem:[#allocation2 + $0x88] sm:$0xff]
        %v1786 = vld [vmem:[#allocation2 + $0x90] sm:$0xff]
        %v1787 = vld [vmem:[#allocation2 + $0x98] sm:$0xff]
        %v1788 = vld [vmem:[#allocation2 + $0xa0] sm:$0xff]
        %v1789 = vld [vmem:[#allocation2 + $0xa8] sm:$0xff]
        %v1790 = vld [vmem:[#allocation2 + $0xb0] sm:$0xff]
        %v1791 = vld [vmem:[#allocation2 + $0xb8] sm:$0xff]
        %v1792 = vld [vmem:[#allocation2 + $0xc0] sm:$0xff]
        %v1793 = vld [vmem:[#allocation2 + $0xc8] sm:$0xff]
        %v1794 = vld [vmem:[#allocation2 + $0xd0] sm:$0xff]
        %v1795 = vld [vmem:[#allocation2 + $0xd8] sm:$0xff]
        %v1796 = vld [vmem:[#allocation2 + $0xe0] sm:$0xff]
        %v1797 = vld [vmem:[#allocation2 + $0xe8] sm:$0xff]
        %v1798 = vld [vmem:[#allocation2 + $0xf0] sm:$0xff]
        %v1799 = vld [vmem:[#allocation2 + $0xf8] sm:$0xff]
        %v1800 = vld [vmem:[#allocation2 + $0x100] sm:$0xff]
        %v1801 = vld [vmem:[#allocation2 + $0x108] sm:$0xff]
        %v1802 = vld [vmem:[#allocation2 + $0x110] sm:$0xff]
        %v1803 = vld [vmem:[#allocation2 + $0x118] sm:$0xff]
        %v1804 = vld [vmem:[#allocation2 + $0x120] sm:$0xff]
        %v1805 = vld [vmem:[#allocation2 + $0x128] sm:$0xff]
        %v1806 = vld [vmem:[#allocation2 + $0x130] sm:$0xff]
        %v1807 = vld [vmem:[#allocation2 + $0x138] sm:$0xff]
        %v1808 = vld [vmem:[#allocation2 + $0x140] sm:$0xff]
        %v1809 = vld [vmem:[#allocation2 + $0x148] sm:$0xff]
        %v1810 = vld [vmem:[#allocation2 + $0x150] sm:$0xff]
        %v1811 = vld [vmem:[#allocation2 + $0x158] sm:$0xff]
        %v1812 = vld [vmem:[#allocation2 + $0x160] sm:$0xff]
        %v1813 = vld [vmem:[#allocation2 + $0x168] sm:$0xff]
        %v1814 = vld [vmem:[#allocation2 + $0x170] sm:$0xff]
        %v1815 = vld [vmem:[#allocation2 + $0x178] sm:$0xff]
        %v1816 = vld [vmem:[#allocation2 + $0x180] sm:$0xff]
        %v1817 = vld [vmem:[#allocation2 + $0x188] sm:$0xff]
        %v1818 = vld [vmem:[%s575] sm:$0xff]
        %v1819 = vld [vmem:[%s575 + $0x8] sm:$0xff]
        %v1820 = vld [vmem:[%s575 + $0x10] sm:$0xff]
        %v1821 = vld [vmem:[%s575 + $0x18] sm:$0xff]
        %v1822 = vld [vmem:[%s575 + $0x20] sm:$0xff]
        %v1823 = vld [vmem:[%s575 + $0x28] sm:$0xff]
        %v1824 = vld [vmem:[%s575 + $0x30] sm:$0xff]
        %v1825 = vld [vmem:[%s575 + $0x38] sm:$0xff]
        %v1826 = vld [vmem:[%s575 + $0x40] sm:$0xff]
        %v1827 = vld [vmem:[%s575 + $0x48] sm:$0xff]
        %v1828 = vld [vmem:[%s575 + $0x50] sm:$0xff]
        %v1829 = vld [vmem:[%s575 + $0x58] sm:$0xff]
        %v1830 = vld [vmem:[%s575 + $0x60] sm:$0xff]
        %v1831 = vld [vmem:[%s575 + $0x68] sm:$0xff]
        %v1832 = vld [vmem:[%s575 + $0x70] sm:$0xff]
        %v1833 = vld [vmem:[%s575 + $0x78] sm:$0xff]
        %v1834 = vld [vmem:[%s575 + $0x80] sm:$0xff]
        %v1835 = vld [vmem:[%s575 + $0x88] sm:$0xff]
        %v1836 = vld [vmem:[%s575 + $0x90] sm:$0xff]
        %v1837 = vld [vmem:[%s575 + $0x98] sm:$0xff]
        %v1838 = vld [vmem:[%s575 + $0xa0] sm:$0xff]
        %v1839 = vld [vmem:[%s575 + $0xa8] sm:$0xff]
        %v1840 = vld [vmem:[%s575 + $0xb0] sm:$0xff]
        %v1841 = vld [vmem:[%s575 + $0xb8] sm:$0xff]
        %v1842 = vld [vmem:[%s575 + $0xc0] sm:$0xff]
        %v1843 = vld [vmem:[%s575 + $0xc8] sm:$0xff]
        %v1844 = vld [vmem:[%s575 + $0xd0] sm:$0xff]
        %v1845 = vld [vmem:[%s575 + $0xd8] sm:$0xff]
        %v1846 = vld [vmem:[%s575 + $0xe0] sm:$0xff]
        %v1847 = vld [vmem:[%s575 + $0xe8] sm:$0xff]
        %v1848 = vld [vmem:[%s575 + $0xf0] sm:$0xff]
        %v1849 = vld [vmem:[%s575 + $0xf8] sm:$0xff]
        %v1850 = vld [vmem:[%s575 + $0x100] sm:$0xff]
        %v1851 = vld [vmem:[%s575 + $0x108] sm:$0xff]
        %v1852 = vld [vmem:[%s575 + $0x110] sm:$0xff]
        %v1853 = vld [vmem:[%s575 + $0x118] sm:$0xff]
        %v1854 = vld [vmem:[%s575 + $0x120] sm:$0xff]
        %v1855 = vld [vmem:[%s575 + $0x128] sm:$0xff]
        %v1856 = vld [vmem:[%s575 + $0x130] sm:$0xff]
        %v1857 = vld [vmem:[%s575 + $0x138] sm:$0xff]
        %v1858 = vld [vmem:[%s575 + $0x140] sm:$0xff]
        %v1859 = vld [vmem:[%s575 + $0x148] sm:$0xff]
        %v1860 = vld [vmem:[%s575 + $0x150] sm:$0xff]
        %v1861 = vld [vmem:[%s575 + $0x158] sm:$0xff]
        %v1862 = vld [vmem:[%s575 + $0x160] sm:$0xff]
        %v1863 = vld [vmem:[%s575 + $0x168] sm:$0xff]
        %v1864 = vld [vmem:[%s575 + $0x170] sm:$0xff]
        %v1865 = vld [vmem:[%s575 + $0x178] sm:$0xff]
        %v1866 = vld [vmem:[%s575 + $0x180] sm:$0xff]
        %v1867 = vld [vmem:[%s575 + $0x188] sm:$0xff]
        %v1868 = vld [vmem:[%s575 + $0x190] sm:$0xff]
        %v1869 = vld [vmem:[%s575 + $0x198] sm:$0xff]
        %v1870 = vld [vmem:[%s575 + $0x1a0] sm:$0xff]
        %v1871 = vld [vmem:[%s575 + $0x1a8] sm:$0xff]
        %v1872 = vld [vmem:[%s575 + $0x1b0] sm:$0xff]
        %v1873 = vld [vmem:[%s575 + $0x1b8] sm:$0xff]
        %v1874 = vld [vmem:[%s575 + $0x1c0] sm:$0xff]
        %v1875 = vld [vmem:[%s575 + $0x1c8] sm:$0xff]
        %v1876 = vld [vmem:[%s575 + $0x1d0] sm:$0xff]
        %v1877 = vld [vmem:[%s575 + $0x1d8] sm:$0xff]
        %v1878 = vld [vmem:[%s575 + $0x1e0] sm:$0xff]
        %v1879 = vld [vmem:[%s575 + $0x1e8] sm:$0xff]
        %v1880 = vld [vmem:[%s575 + $0x1f0] sm:$0xff]
        %v1881 = vld [vmem:[%s575 + $0x1f8] sm:$0xff]
        %v1882 = vld [vmem:[%s575 + $0x200] sm:$0xff]
        %v1883 = vld [vmem:[%s575 + $0x208] sm:$0xff]
        %v1884 = vld [vmem:[%s575 + $0x210] sm:$0xff]
        %v1885 = vld [vmem:[%s575 + $0x218] sm:$0xff]
        %v1886 = vld [vmem:[%s575 + $0x220] sm:$0xff]
        %v1887 = vld [vmem:[%s575 + $0x228] sm:$0xff]
        %v1888 = vld [vmem:[%s575 + $0x230] sm:$0xff]
        %v1889 = vld [vmem:[%s575 + $0x238] sm:$0xff]
        %v1890 = vld [vmem:[%s575 + $0x240] sm:$0xff]
        %v1891 = vld [vmem:[%s575 + $0x248] sm:$0xff]
        %v1892 = vld [vmem:[%s575 + $0x250] sm:$0xff]
        %v1893 = vld [vmem:[%s575 + $0x258] sm:$0xff]
        %v1894 = vld [vmem:[%s575 + $0x260] sm:$0xff]
        %v1895 = vld [vmem:[%s575 + $0x268] sm:$0xff]
        %v1896 = vld [vmem:[%s575 + $0x270] sm:$0xff]
        %v1897 = vld [vmem:[%s575 + $0x278] sm:$0xff]
        %v1898 = vld [vmem:[%s575 + $0x280] sm:$0xff]
        %v1899 = vld [vmem:[%s575 + $0x288] sm:$0xff]
        %v1900 = vld [vmem:[%s575 + $0x290] sm:$0xff]
        %v1901 = vld [vmem:[%s575 + $0x298] sm:$0xff]
        %v1902 = vld [vmem:[%s575 + $0x2a0] sm:$0xff]
        %v1903 = vld [vmem:[%s575 + $0x2a8] sm:$0xff]
        %v1904 = vld [vmem:[%s575 + $0x2b0] sm:$0xff]
        %v1905 = vld [vmem:[%s575 + $0x2b8] sm:$0xff]
        %v1906 = vld [vmem:[%s575 + $0x2c0] sm:$0xff]
        %v1907 = vld [vmem:[%s575 + $0x2c8] sm:$0xff]
        %v1908 = vld [vmem:[%s575 + $0x2d0] sm:$0xff]
        %v1909 = vld [vmem:[%s575 + $0x2d8] sm:$0xff]
        %v1910 = vld [vmem:[%s575 + $0x2e0] sm:$0xff]
        %v1911 = vld [vmem:[%s575 + $0x2e8] sm:$0xff]
        %v1912 = vld [vmem:[%s575 + $0x2f0] sm:$0xff]
        %v1913 = vld [vmem:[%s575 + $0x2f8] sm:$0xff]
        %v1914 = vld [vmem:[%s575 + $0x300] sm:$0xff]
        %v1915 = vld [vmem:[%s575 + $0x308] sm:$0xff]
        %v1916 = vld [vmem:[%s575 + $0x310] sm:$0xff]
        %v1917 = vld [vmem:[%s575 + $0x318] sm:$0xff]
        %v1918 = vld [vmem:[%s575 + $0x320] sm:$0xff]
        %v1919 = vld [vmem:[%s575 + $0x328] sm:$0xff]
        %v1920 = vld [vmem:[%s575 + $0x330] sm:$0xff]
        %v1921 = vld [vmem:[%s575 + $0x338] sm:$0xff]
        %v1922 = vld [vmem:[%s575 + $0x340] sm:$0xff]
        %v1923 = vld [vmem:[%s575 + $0x348] sm:$0xff]
        %v1924 = vld [vmem:[%s575 + $0x350] sm:$0xff]
        %v1925 = vld [vmem:[%s575 + $0x358] sm:$0xff]
        %v1926 = vld [vmem:[%s575 + $0x360] sm:$0xff]
        %v1927 = vld [vmem:[%s575 + $0x368] sm:$0xff]
        %v1928 = vld [vmem:[%s575 + $0x370] sm:$0xff]
        %v1929 = vld [vmem:[%s575 + $0x378] sm:$0xff]
        %v1930 = vld [vmem:[%s575 + $0x380] sm:$0xff]
        %v1931 = vld [vmem:[%s575 + $0x388] sm:$0xff]
        %v1932 = vld [vmem:[%s575 + $0x390] sm:$0xff]
        %v1933 = vld [vmem:[%s575 + $0x398] sm:$0xff]
        %v1934 = vld [vmem:[%s575 + $0x3a0] sm:$0xff]
        %v1935 = vld [vmem:[%s575 + $0x3a8] sm:$0xff]
        %v1936 = vld [vmem:[%s575 + $0x3b0] sm:$0xff]
        %v1937 = vld [vmem:[%s575 + $0x3b8] sm:$0xff]
        %v1938 = vld [vmem:[%s575 + $0x3c0] sm:$0xff]
        %v1939 = vld [vmem:[%s575 + $0x3c8] sm:$0xff]
        %v1940 = vld [vmem:[%s575 + $0x3d0] sm:$0xff]
        %v1941 = vld [vmem:[%s575 + $0x3d8] sm:$0xff]
        %v1942 = vld [vmem:[%s575 + $0x3e0] sm:$0xff]
        %v1943 = vld [vmem:[%s575 + $0x3e8] sm:$0xff]
        %v1944 = vld [vmem:[%s575 + $0x3f0] sm:$0xff]
        %v1945 = vld [vmem:[%s575 + $0x3f8] sm:$0xff]
        %1946 = vmatprep.subr.mxu0 %v1849
        %1947 = vmatpush1.msra.mxu0 %v1848
        %1948 = vmatprep.subr.mxu0 %v1847
        %1949 = vmatpush1.msra.mxu0 %v1846
        %1950 = vmatprep.subr.mxu0 %v1845
        %1951 = vmatpush1.msra.mxu0 %v1844
        %1952 = vmatprep.subr.mxu0 %v1843
        %1953 = vmatpush1.msra.mxu0 %v1842
        %1954 = vmatprep.subr.mxu0 %v1841
        %1955 = vmatpush1.msra.mxu0 %v1840
        %1956 = vmatprep.subr.mxu0 %v1839
        %1957 = vmatpush1.msra.mxu0 %v1838
        %1958 = vmatprep.subr.mxu0 %v1837
        %1959 = vmatpush1.msra.mxu0 %v1836
        %1960 = vmatprep.subr.mxu0 %v1835
        %1961 = vmatpush1.msra.mxu0 %v1834
        %1962 = vmatprep.subr.mxu0 %v1833
        %1963 = vmatpush1.msra.mxu0 %v1832
        %1964 = vmatprep.subr.mxu0 %v1831
        %1965 = vmatpush1.msra.mxu0 %v1830
        %1966 = vmatprep.subr.mxu0 %v1829
        %1967 = vmatpush1.msra.mxu0 %v1828
        %1968 = vmatprep.subr.mxu0 %v1827
        %1969 = vmatpush1.msra.mxu0 %v1826
        %1970 = vmatprep.subr.mxu0 %v1825
        %1971 = vmatpush1.msra.mxu0 %v1824
        %1972 = vmatprep.subr.mxu0 %v1823
        %1973 = vmatpush1.msra.mxu0 %v1822
        %1974 = vmatprep.subr.mxu0 %v1821
        %1975 = vmatpush1.msra.mxu0 %v1820
        %1976 = vmatprep.subr.mxu0 %v1819
        %1977 = vmatpush1.msra.mxu0 %v1818
        %1978 = vmatprep.subr.mxu0 %v1881
        %1979 = vmatpush2.msra.mxu0 %v1880
        %1980 = vmatprep.subr.mxu0 %v1879
        %1981 = vmatpush2.msra.mxu0 %v1878
        %1982 = vmatprep.subr.mxu0 %v1877
        %1983 = vmatpush2.msra.mxu0 %v1876
        %1984 = vmatprep.subr.mxu0 %v1875
        %1985 = vmatpush2.msra.mxu0 %v1874
        %1986 = vmatprep.subr.mxu0 %v1873
        %1987 = vmatpush2.msra.mxu0 %v1872
        %1988 = vmatprep.subr.mxu0 %v1871
        %1989 = vmatpush2.msra.mxu0 %v1870
        %1990 = vmatprep.subr.mxu0 %v1869
        %1991 = vmatpush2.msra.mxu0 %v1868
        %1992 = vmatprep.subr.mxu0 %v1867
        %1993 = vmatpush2.msra.mxu0 %v1866
        %1994 = vmatprep.subr.mxu0 %v1865
        %1995 = vmatpush2.msra.mxu0 %v1864
        %1996 = vmatprep.subr.mxu0 %v1863
        %1997 = vmatpush2.msra.mxu0 %v1862
        %1998 = vmatprep.subr.mxu0 %v1861
        %1999 = vmatpush2.msra.mxu0 %v1860
        %2000 = vmatprep.subr.mxu0 %v1859
        %2001 = vmatpush2.msra.mxu0 %v1858
        %2002 = vmatprep.subr.mxu0 %v1857
        %2003 = vmatpush2.msra.mxu0 %v1856
        %2004 = vmatprep.subr.mxu0 %v1855
        %2005 = vmatpush2.msra.mxu0 %v1854
        %2006 = vmatprep.subr.mxu0 %v1853
        %2007 = vmatpush2.msra.mxu0 %v1852
        %2008 = vmatprep.subr.mxu0 %v1851
        %2009 = vmatpush2.msra.mxu0 %v1850
        %2010 = vmatprep.mubr.f32.mxu0 %v1669
        %2011 = vmatmul.mubr.f32.gmra.mxu0 %v1668
        %v2012 = vpop.f32.mrf.mxu0
        %v2013 = vadd.f32 0.0, %v2012
        %v2014 = vpop.f32.mrf.mxu0
        %v2015 = vadd.f32 0.0, %v2014
        %2016 = vmatprep.mubr.f32.mxu0 %v1673
        %2017 = vmatmul.mubr.f32.gmra.mxu0 %v1672
        %v2018 = vpop.f32.mrf.mxu0
        %v2019 = vadd.f32 0.0, %v2018
        %v2020 = vpop.f32.mrf.mxu0
        %v2021 = vadd.f32 0.0, %v2020
        %2022 = vmatprep.mubr.f32.mxu0 %v1677
        %2023 = vmatmul.mubr.f32.gmra.mxu0 %v1676
        %v2024 = vpop.f32.mrf.mxu0
        %v2025 = vadd.f32 0.0, %v2024
        %v2026 = vpop.f32.mrf.mxu0
        %v2027 = vadd.f32 0.0, %v2026
        %2028 = vmatprep.mubr.f32.mxu0 %v1681
        %2029 = vmatmul.mubr.f32.gmra.mxu0 %v1680
        %v2030 = vpop.f32.mrf.mxu0
        %v2031 = vadd.f32 0.0, %v2030
        %v2032 = vpop.f32.mrf.mxu0
        %v2033 = vadd.f32 0.0, %v2032
        %2034 = vmatprep.mubr.f32.mxu0 %v1685
        %2035 = vmatmul.mubr.f32.gmra.mxu0 %v1684
        %v2036 = vpop.f32.mrf.mxu0
        %v2037 = vadd.f32 0.0, %v2036
        %v2038 = vpop.f32.mrf.mxu0
        %v2039 = vadd.f32 0.0, %v2038
        %2040 = vmatprep.mubr.f32.mxu0 %v1689
        %2041 = vmatmul.mubr.f32.gmra.mxu0 %v1688
        %v2042 = vpop.f32.mrf.mxu0
        %v2043 = vadd.f32 0.0, %v2042
        %v2044 = vpop.f32.mrf.mxu0
        %v2045 = vadd.f32 0.0, %v2044
        %2046 = vmatprep.mubr.f32.mxu0 %v1693
        %2047 = vmatmul.mubr.f32.gmra.mxu0 %v1692
        %v2048 = vpop.f32.mrf.mxu0
        %v2049 = vadd.f32 0.0, %v2048
        %v2050 = vpop.f32.mrf.mxu0
        %v2051 = vadd.f32 0.0, %v2050
        %2052 = vmatprep.mubr.f32.mxu0 %v1697
        %2053 = vmatmul.mubr.f32.gmra.mxu0 %v1696
        %v2054 = vpop.f32.mrf.mxu0
        %v2055 = vadd.f32 0.0, %v2054
        %v2056 = vpop.f32.mrf.mxu0
        %v2057 = vadd.f32 0.0, %v2056
        %2058 = vmatprep.mubr.f32.mxu0 %v1701
        %2059 = vmatmul.mubr.f32.gmra.mxu0 %v1700
        %v2060 = vpop.f32.mrf.mxu0
        %v2061 = vadd.f32 0.0, %v2060
        %v2062 = vpop.f32.mrf.mxu0
        %v2063 = vadd.f32 0.0, %v2062
        %2064 = vmatprep.mubr.f32.mxu0 %v1705
        %2065 = vmatmul.mubr.f32.gmra.mxu0 %v1704
        %v2066 = vpop.f32.mrf.mxu0
        %v2067 = vadd.f32 0.0, %v2066
        %v2068 = vpop.f32.mrf.mxu0
        %v2069 = vadd.f32 0.0, %v2068
        %2070 = vmatprep.mubr.f32.mxu0 %v1709
        %2071 = vmatmul.mubr.f32.gmra.mxu0 %v1708
        %v2072 = vpop.f32.mrf.mxu0
        %v2073 = vadd.f32 0.0, %v2072
        %v2074 = vpop.f32.mrf.mxu0
        %v2075 = vadd.f32 0.0, %v2074
        %2076 = vmatprep.mubr.f32.mxu0 %v1713
        %2077 = vmatmul.mubr.f32.gmra.mxu0 %v1712
        %v2078 = vpop.f32.mrf.mxu0
        %v2079 = vadd.f32 0.0, %v2078
        %v2080 = vpop.f32.mrf.mxu0
        %v2081 = vadd.f32 0.0, %v2080
        %2082 = vmatprep.mubr.f32.mxu0 %v1717
        %2083 = vmatmul.mubr.f32.gmra.mxu0 %v1716
        %v2084 = vpop.f32.mrf.mxu0
        %v2085 = vadd.f32 0.0, %v2084
        %v2086 = vpop.f32.mrf.mxu0
        %v2087 = vadd.f32 0.0, %v2086
        %2088 = vmatprep.mubr.f32.mxu0 %v1721
        %2089 = vmatmul.mubr.f32.gmra.mxu0 %v1720
        %v2090 = vpop.f32.mrf.mxu0
        %v2091 = vadd.f32 0.0, %v2090
        %v2092 = vpop.f32.mrf.mxu0
        %v2093 = vadd.f32 0.0, %v2092
        %2094 = vmatprep.mubr.f32.mxu0 %v1725
        %2095 = vmatmul.mubr.f32.gmra.mxu0 %v1724
        %v2096 = vpop.f32.mrf.mxu0
        %v2097 = vadd.f32 0.0, %v2096
        %v2098 = vpop.f32.mrf.mxu0
        %v2099 = vadd.f32 0.0, %v2098
        %2100 = vmatprep.mubr.f32.mxu0 %v1729
        %2101 = vmatmul.mubr.f32.gmra.mxu0 %v1728
        %v2102 = vpop.f32.mrf.mxu0
        %v2103 = vadd.f32 0.0, %v2102
        %v2104 = vpop.f32.mrf.mxu0
        %v2105 = vadd.f32 0.0, %v2104
        %2106 = vmatprep.mubr.f32.mxu0 %v1733
        %2107 = vmatmul.mubr.f32.gmra.mxu0 %v1732
        %v2108 = vpop.f32.mrf.mxu0
        %v2109 = vadd.f32 0.0, %v2108
        %v2110 = vpop.f32.mrf.mxu0
        %v2111 = vadd.f32 0.0, %v2110
        %2112 = vmatprep.mubr.f32.mxu0 %v1737
        %2113 = vmatmul.mubr.f32.gmra.mxu0 %v1736
        %v2114 = vpop.f32.mrf.mxu0
        %v2115 = vadd.f32 0.0, %v2114
        %v2116 = vpop.f32.mrf.mxu0
        %v2117 = vadd.f32 0.0, %v2116
        %2118 = vmatprep.mubr.f32.mxu0 %v1741
        %2119 = vmatmul.mubr.f32.gmra.mxu0 %v1740
        %v2120 = vpop.f32.mrf.mxu0
        %v2121 = vadd.f32 0.0, %v2120
        %v2122 = vpop.f32.mrf.mxu0
        %v2123 = vadd.f32 0.0, %v2122
        %2124 = vmatprep.mubr.f32.mxu0 %v1745
        %2125 = vmatmul.mubr.f32.gmra.mxu0 %v1744
        %v2126 = vpop.f32.mrf.mxu0
        %v2127 = vadd.f32 0.0, %v2126
        %v2128 = vpop.f32.mrf.mxu0
        %v2129 = vadd.f32 0.0, %v2128
        %2130 = vmatprep.mubr.f32.mxu0 %v1749
        %2131 = vmatmul.mubr.f32.gmra.mxu0 %v1748
        %v2132 = vpop.f32.mrf.mxu0
        %v2133 = vadd.f32 0.0, %v2132
        %v2134 = vpop.f32.mrf.mxu0
        %v2135 = vadd.f32 0.0, %v2134
        %2136 = vmatprep.mubr.f32.mxu0 %v1753
        %2137 = vmatmul.mubr.f32.gmra.mxu0 %v1752
        %v2138 = vpop.f32.mrf.mxu0
        %v2139 = vadd.f32 0.0, %v2138
        %v2140 = vpop.f32.mrf.mxu0
        %v2141 = vadd.f32 0.0, %v2140
        %2142 = vmatprep.mubr.f32.mxu0 %v1757
        %2143 = vmatmul.mubr.f32.gmra.mxu0 %v1756
        %v2144 = vpop.f32.mrf.mxu0
        %v2145 = vadd.f32 0.0, %v2144
        %v2146 = vpop.f32.mrf.mxu0
        %v2147 = vadd.f32 0.0, %v2146
        %2148 = vmatprep.mubr.f32.mxu0 %v1761
        %2149 = vmatmul.mubr.f32.gmra.mxu0 %v1760
        %v2150 = vpop.f32.mrf.mxu0
        %v2151 = vadd.f32 0.0, %v2150
        %v2152 = vpop.f32.mrf.mxu0
        %v2153 = vadd.f32 0.0, %v2152
        %2154 = vmatprep.mubr.f32.mxu0 %v1765
        %2155 = vmatmul.mubr.f32.gmra.mxu0 %v1764
        %v2156 = vpop.f32.mrf.mxu0
        %v2157 = vadd.f32 0.0, %v2156
        %v2158 = vpop.f32.mrf.mxu0
        %v2159 = vadd.f32 0.0, %v2158
        %2160 = vdwg.mxu0
        %2161 = vmatprep.subr.mxu0 %v1913
        %2162 = vmatpush1.msra.mxu0 %v1912
        %2163 = vmatprep.subr.mxu0 %v1911
        %2164 = vmatpush1.msra.mxu0 %v1910
        %2165 = vmatprep.subr.mxu0 %v1909
        %2166 = vmatpush1.msra.mxu0 %v1908
        %2167 = vmatprep.subr.mxu0 %v1907
        %2168 = vmatpush1.msra.mxu0 %v1906
        %2169 = vmatprep.subr.mxu0 %v1905
        %2170 = vmatpush1.msra.mxu0 %v1904
        %2171 = vmatprep.subr.mxu0 %v1903
        %2172 = vmatpush1.msra.mxu0 %v1902
        %2173 = vmatprep.subr.mxu0 %v1901
        %2174 = vmatpush1.msra.mxu0 %v1900
        %2175 = vmatprep.subr.mxu0 %v1899
        %2176 = vmatpush1.msra.mxu0 %v1898
        %2177 = vmatprep.subr.mxu0 %v1897
        %2178 = vmatpush1.msra.mxu0 %v1896
        %2179 = vmatprep.subr.mxu0 %v1895
        %2180 = vmatpush1.msra.mxu0 %v1894
        %2181 = vmatprep.subr.mxu0 %v1893
        %2182 = vmatpush1.msra.mxu0 %v1892
        %2183 = vmatprep.subr.mxu0 %v1891
        %2184 = vmatpush1.msra.mxu0 %v1890
        %2185 = vmatprep.subr.mxu0 %v1889
        %2186 = vmatpush1.msra.mxu0 %v1888
        %2187 = vmatprep.subr.mxu0 %v1887
        %2188 = vmatpush1.msra.mxu0 %v1886
        %2189 = vmatprep.subr.mxu0 %v1885
        %2190 = vmatpush1.msra.mxu0 %v1884
        %2191 = vmatprep.subr.mxu0 %v1883
        %2192 = vmatpush1.msra.mxu0 %v1882
        %2193 = vmatprep.subr.mxu0 %v1945
        %2194 = vmatpush2.msra.mxu0 %v1944
        %2195 = vmatprep.subr.mxu0 %v1943
        %2196 = vmatpush2.msra.mxu0 %v1942
        %2197 = vmatprep.subr.mxu0 %v1941
        %2198 = vmatpush2.msra.mxu0 %v1940
        %2199 = vmatprep.subr.mxu0 %v1939
        %2200 = vmatpush2.msra.mxu0 %v1938
        %2201 = vmatprep.subr.mxu0 %v1937
        %2202 = vmatpush2.msra.mxu0 %v1936
        %2203 = vmatprep.subr.mxu0 %v1935
        %2204 = vmatpush2.msra.mxu0 %v1934
        %2205 = vmatprep.subr.mxu0 %v1933
        %2206 = vmatpush2.msra.mxu0 %v1932
        %2207 = vmatprep.subr.mxu0 %v1931
        %2208 = vmatpush2.msra.mxu0 %v1930
        %2209 = vmatprep.subr.mxu0 %v1929
        %2210 = vmatpush2.msra.mxu0 %v1928
        %2211 = vmatprep.subr.mxu0 %v1927
        %2212 = vmatpush2.msra.mxu0 %v1926
        %2213 = vmatprep.subr.mxu0 %v1925
        %2214 = vmatpush2.msra.mxu0 %v1924
        %2215 = vmatprep.subr.mxu0 %v1923
        %2216 = vmatpush2.msra.mxu0 %v1922
        %2217 = vmatprep.subr.mxu0 %v1921
        %2218 = vmatpush2.msra.mxu0 %v1920
        %2219 = vmatprep.subr.mxu0 %v1919
        %2220 = vmatpush2.msra.mxu0 %v1918
        %2221 = vmatprep.subr.mxu0 %v1917
        %2222 = vmatpush2.msra.mxu0 %v1916
        %2223 = vmatprep.subr.mxu0 %v1915
        %2224 = vmatpush2.msra.mxu0 %v1914
        %2225 = vmatprep.mubr.f32.mxu0 %v1671
        %2226 = vmatmul.mubr.f32.gmra.mxu0 %v1670
        %v2227 = vpop.f32.mrf.mxu0
        %v2228 = vadd.f32 %v2013, %v2227
        %v2229 = vpop.f32.mrf.mxu0
        %v2230 = vadd.f32 %v2015, %v2229
        %2231 = vmatprep.mubr.f32.mxu0 %v1675
        %2232 = vmatmul.mubr.f32.gmra.mxu0 %v1674
        %v2233 = vpop.f32.mrf.mxu0
        %v2234 = vadd.f32 %v2019, %v2233
        %v2235 = vpop.f32.mrf.mxu0
        %v2236 = vadd.f32 %v2021, %v2235
        %2237 = vmatprep.mubr.f32.mxu0 %v1679
        %2238 = vmatmul.mubr.f32.gmra.mxu0 %v1678
        %v2239 = vpop.f32.mrf.mxu0
        %v2240 = vadd.f32 %v2025, %v2239
        %v2241 = vpop.f32.mrf.mxu0
        %v2242 = vadd.f32 %v2027, %v2241
        %2243 = vmatprep.mubr.f32.mxu0 %v1683
        %2244 = vmatmul.mubr.f32.gmra.mxu0 %v1682
        %v2245 = vpop.f32.mrf.mxu0
        %v2246 = vadd.f32 %v2031, %v2245
        %v2247 = vpop.f32.mrf.mxu0
        %v2248 = vadd.f32 %v2033, %v2247
        %2249 = vmatprep.mubr.f32.mxu0 %v1687
        %2250 = vmatmul.mubr.f32.gmra.mxu0 %v1686
        %v2251 = vpop.f32.mrf.mxu0
        %v2252 = vadd.f32 %v2037, %v2251
        %v2253 = vpop.f32.mrf.mxu0
        %v2254 = vadd.f32 %v2039, %v2253
        %2255 = vmatprep.mubr.f32.mxu0 %v1691
        %2256 = vmatmul.mubr.f32.gmra.mxu0 %v1690
        %v2257 = vpop.f32.mrf.mxu0
        %v2258 = vadd.f32 %v2043, %v2257
        %v2259 = vpop.f32.mrf.mxu0
        %v2260 = vadd.f32 %v2045, %v2259
        %2261 = vmatprep.mubr.f32.mxu0 %v1695
        %2262 = vmatmul.mubr.f32.gmra.mxu0 %v1694
        %v2263 = vpop.f32.mrf.mxu0
        %v2264 = vadd.f32 %v2049, %v2263
        %v2265 = vpop.f32.mrf.mxu0
        %v2266 = vadd.f32 %v2051, %v2265
        %2267 = vmatprep.mubr.f32.mxu0 %v1699
        %2268 = vmatmul.mubr.f32.gmra.mxu0 %v1698
        %v2269 = vpop.f32.mrf.mxu0
        %v2270 = vadd.f32 %v2055, %v2269
        %v2271 = vpop.f32.mrf.mxu0
        %v2272 = vadd.f32 %v2057, %v2271
        %2273 = vmatprep.mubr.f32.mxu0 %v1703
        %2274 = vmatmul.mubr.f32.gmra.mxu0 %v1702
        %v2275 = vpop.f32.mrf.mxu0
        %v2276 = vadd.f32 %v2061, %v2275
        %v2277 = vpop.f32.mrf.mxu0
        %v2278 = vadd.f32 %v2063, %v2277
        %2279 = vmatprep.mubr.f32.mxu0 %v1707
        %2280 = vmatmul.mubr.f32.gmra.mxu0 %v1706
        %v2281 = vpop.f32.mrf.mxu0
        %v2282 = vadd.f32 %v2067, %v2281
        %v2283 = vpop.f32.mrf.mxu0
        %v2284 = vadd.f32 %v2069, %v2283
        %2285 = vmatprep.mubr.f32.mxu0 %v1711
        %2286 = vmatmul.mubr.f32.gmra.mxu0 %v1710
        %v2287 = vpop.f32.mrf.mxu0
        %v2288 = vadd.f32 %v2073, %v2287
        %v2289 = vpop.f32.mrf.mxu0
        %v2290 = vadd.f32 %v2075, %v2289
        %2291 = vmatprep.mubr.f32.mxu0 %v1715
        %2292 = vmatmul.mubr.f32.gmra.mxu0 %v1714
        %v2293 = vpop.f32.mrf.mxu0
        %v2294 = vadd.f32 %v2079, %v2293
        %v2295 = vpop.f32.mrf.mxu0
        %v2296 = vadd.f32 %v2081, %v2295
        %2297 = vmatprep.mubr.f32.mxu0 %v1719
        %2298 = vmatmul.mubr.f32.gmra.mxu0 %v1718
        %v2299 = vpop.f32.mrf.mxu0
        %v2300 = vadd.f32 %v2085, %v2299
        %v2301 = vpop.f32.mrf.mxu0
        %v2302 = vadd.f32 %v2087, %v2301
        %2303 = vmatprep.mubr.f32.mxu0 %v1723
        %2304 = vmatmul.mubr.f32.gmra.mxu0 %v1722
        %v2305 = vpop.f32.mrf.mxu0
        %v2306 = vadd.f32 %v2091, %v2305
        %v2307 = vpop.f32.mrf.mxu0
        %v2308 = vadd.f32 %v2093, %v2307
        %2309 = vmatprep.mubr.f32.mxu0 %v1727
        %2310 = vmatmul.mubr.f32.gmra.mxu0 %v1726
        %v2311 = vpop.f32.mrf.mxu0
        %v2312 = vadd.f32 %v2097, %v2311
        %v2313 = vpop.f32.mrf.mxu0
        %v2314 = vadd.f32 %v2099, %v2313
        %2315 = vmatprep.mubr.f32.mxu0 %v1731
        %2316 = vmatmul.mubr.f32.gmra.mxu0 %v1730
        %v2317 = vpop.f32.mrf.mxu0
        %v2318 = vadd.f32 %v2103, %v2317
        %v2319 = vpop.f32.mrf.mxu0
        %v2320 = vadd.f32 %v2105, %v2319
        %2321 = vmatprep.mubr.f32.mxu0 %v1735
        %2322 = vmatmul.mubr.f32.gmra.mxu0 %v1734
        %v2323 = vpop.f32.mrf.mxu0
        %v2324 = vadd.f32 %v2109, %v2323
        %v2325 = vpop.f32.mrf.mxu0
        %v2326 = vadd.f32 %v2111, %v2325
        %2327 = vmatprep.mubr.f32.mxu0 %v1739
        %2328 = vmatmul.mubr.f32.gmra.mxu0 %v1738
        %v2329 = vpop.f32.mrf.mxu0
        %v2330 = vadd.f32 %v2115, %v2329
        %v2331 = vpop.f32.mrf.mxu0
        %v2332 = vadd.f32 %v2117, %v2331
        %2333 = vmatprep.mubr.f32.mxu0 %v1743
        %2334 = vmatmul.mubr.f32.gmra.mxu0 %v1742
        %v2335 = vpop.f32.mrf.mxu0
        %v2336 = vadd.f32 %v2121, %v2335
        %v2337 = vpop.f32.mrf.mxu0
        %v2338 = vadd.f32 %v2123, %v2337
        %2339 = vmatprep.mubr.f32.mxu0 %v1747
        %2340 = vmatmul.mubr.f32.gmra.mxu0 %v1746
        %v2341 = vpop.f32.mrf.mxu0
        %v2342 = vadd.f32 %v2127, %v2341
        %v2343 = vpop.f32.mrf.mxu0
        %v2344 = vadd.f32 %v2129, %v2343
        %2345 = vmatprep.mubr.f32.mxu0 %v1751
        %2346 = vmatmul.mubr.f32.gmra.mxu0 %v1750
        %v2347 = vpop.f32.mrf.mxu0
        %v2348 = vadd.f32 %v2133, %v2347
        %v2349 = vpop.f32.mrf.mxu0
        %v2350 = vadd.f32 %v2135, %v2349
        %2351 = vmatprep.mubr.f32.mxu0 %v1755
        %2352 = vmatmul.mubr.f32.gmra.mxu0 %v1754
        %v2353 = vpop.f32.mrf.mxu0
        %v2354 = vadd.f32 %v2139, %v2353
        %v2355 = vpop.f32.mrf.mxu0
        %v2356 = vadd.f32 %v2141, %v2355
        %2357 = vmatprep.mubr.f32.mxu0 %v1759
        %2358 = vmatmul.mubr.f32.gmra.mxu0 %v1758
        %v2359 = vpop.f32.mrf.mxu0
        %v2360 = vadd.f32 %v2145, %v2359
        %v2361 = vpop.f32.mrf.mxu0
        %v2362 = vadd.f32 %v2147, %v2361
        %2363 = vmatprep.mubr.f32.mxu0 %v1763
        %2364 = vmatmul.mubr.f32.gmra.mxu0 %v1762
        %v2365 = vpop.f32.mrf.mxu0
        %v2366 = vadd.f32 %v2151, %v2365
        %v2367 = vpop.f32.mrf.mxu0
        %v2368 = vadd.f32 %v2153, %v2367
        %2369 = vmatprep.mubr.f32.mxu0 %v1767
        %2370 = vmatmul.mubr.f32.gmra.mxu0 %v1766
        %v2371 = vpop.f32.mrf.mxu0
        %v2372 = vadd.f32 %v2157, %v2371
        %v2373 = vpop.f32.mrf.mxu0
        %v2374 = vadd.f32 %v2159, %v2373
        %2375 = vdwg.mxu0
        %v2376 = vadd.f32 %v1768, %v2228
        %v2377 = vadd.f32 %v1769, %v2230
        %v2378 = vadd.f32 %v1770, %v2234
        %v2379 = vadd.f32 %v1771, %v2236
        %v2380 = vadd.f32 %v1772, %v2240
        %v2381 = vadd.f32 %v1773, %v2242
        %v2382 = vadd.f32 %v1774, %v2246
        %v2383 = vadd.f32 %v1775, %v2248
        %v2384 = vadd.f32 %v1776, %v2252
        %v2385 = vadd.f32 %v1777, %v2254
        %v2386 = vadd.f32 %v1778, %v2258
        %v2387 = vadd.f32 %v1779, %v2260
        %v2388 = vadd.f32 %v1780, %v2264
        %v2389 = vadd.f32 %v1781, %v2266
        %v2390 = vadd.f32 %v1782, %v2270
        %v2391 = vadd.f32 %v1783, %v2272
        %v2392 = vadd.f32 %v1784, %v2276
        %v2393 = vadd.f32 %v1785, %v2278
        %v2394 = vadd.f32 %v1786, %v2282
        %v2395 = vadd.f32 %v1787, %v2284
        %v2396 = vadd.f32 %v1788, %v2288
        %v2397 = vadd.f32 %v1789, %v2290
        %v2398 = vadd.f32 %v1790, %v2294
        %v2399 = vadd.f32 %v1791, %v2296
        %v2400 = vadd.f32 %v1792, %v2300
        %v2401 = vadd.f32 %v1793, %v2302
        %v2402 = vadd.f32 %v1794, %v2306
        %v2403 = vadd.f32 %v1795, %v2308
        %v2404 = vadd.f32 %v1796, %v2312
        %v2405 = vadd.f32 %v1797, %v2314
        %v2406 = vadd.f32 %v1798, %v2318
        %v2407 = vadd.f32 %v1799, %v2320
        %v2408 = vadd.f32 %v1800, %v2324
        %v2409 = vadd.f32 %v1801, %v2326
        %v2410 = vadd.f32 %v1802, %v2330
        %v2411 = vadd.f32 %v1803, %v2332
        %v2412 = vadd.f32 %v1804, %v2336
        %v2413 = vadd.f32 %v1805, %v2338
        %v2414 = vadd.f32 %v1806, %v2342
        %v2415 = vadd.f32 %v1807, %v2344
        %v2416 = vadd.f32 %v1808, %v2348
        %v2417 = vadd.f32 %v1809, %v2350
        %v2418 = vadd.f32 %v1810, %v2354
        %v2419 = vadd.f32 %v1811, %v2356
        %v2420 = vadd.f32 %v1812, %v2360
        %v2421 = vadd.f32 %v1813, %v2362
        %v2422 = vadd.f32 %v1814, %v2366
        %v2423 = vadd.f32 %v1815, %v2368
        %v2424 = vadd.f32 %v1816, %v2372
        %v2425 = vadd.f32 %v1817, %v2374
        %2426 = vst [vmem:[#allocation2] sm:$0xff] %v2376
        %2427 = vst [vmem:[#allocation2 + $0x8] sm:$0xff] %v2377
        %2428 = vst [vmem:[#allocation2 + $0x10] sm:$0xff] %v2378
        %2429 = vst [vmem:[#allocation2 + $0x18] sm:$0xff] %v2379
        %2430 = vst [vmem:[#allocation2 + $0x20] sm:$0xff] %v2380
        %2431 = vst [vmem:[#allocation2 + $0x28] sm:$0xff] %v2381
        %2432 = vst [vmem:[#allocation2 + $0x30] sm:$0xff] %v2382
        %2433 = vst [vmem:[#allocation2 + $0x38] sm:$0xff] %v2383
        %2434 = vst [vmem:[#allocation2 + $0x40] sm:$0xff] %v2384
        %2435 = vst [vmem:[#allocation2 + $0x48] sm:$0xff] %v2385
        %2436 = vst [vmem:[#allocation2 + $0x50] sm:$0xff] %v2386
        %2437 = vst [vmem:[#allocation2 + $0x58] sm:$0xff] %v2387
        %2438 = vst [vmem:[#allocation2 + $0x60] sm:$0xff] %v2388
        %2439 = vst [vmem:[#allocation2 + $0x68] sm:$0xff] %v2389
        %2440 = vst [vmem:[#allocation2 + $0x70] sm:$0xff] %v2390
        %2441 = vst [vmem:[#allocation2 + $0x78] sm:$0xff] %v2391
        %2442 = vst [vmem:[#allocation2 + $0x80] sm:$0xff] %v2392
        %2443 = vst [vmem:[#allocation2 + $0x88] sm:$0xff] %v2393
        %2444 = vst [vmem:[#allocation2 + $0x90] sm:$0xff] %v2394
        %2445 = vst [vmem:[#allocation2 + $0x98] sm:$0xff] %v2395
        %2446 = vst [vmem:[#allocation2 + $0xa0] sm:$0xff] %v2396
        %2447 = vst [vmem:[#allocation2 + $0xa8] sm:$0xff] %v2397
        %2448 = vst [vmem:[#allocation2 + $0xb0] sm:$0xff] %v2398
        %2449 = vst [vmem:[#allocation2 + $0xb8] sm:$0xff] %v2399
        %2450 = vst [vmem:[#allocation2 + $0xc0] sm:$0xff] %v2400
        %2451 = vst [vmem:[#allocation2 + $0xc8] sm:$0xff] %v2401
        %2452 = vst [vmem:[#allocation2 + $0xd0] sm:$0xff] %v2402
        %2453 = vst [vmem:[#allocation2 + $0xd8] sm:$0xff] %v2403
        %2454 = vst [vmem:[#allocation2 + $0xe0] sm:$0xff] %v2404
        %2455 = vst [vmem:[#allocation2 + $0xe8] sm:$0xff] %v2405
        %2456 = vst [vmem:[#allocation2 + $0xf0] sm:$0xff] %v2406
        %2457 = vst [vmem:[#allocation2 + $0xf8] sm:$0xff] %v2407
        %2458 = vst [vmem:[#allocation2 + $0x100] sm:$0xff] %v2408
        %2459 = vst [vmem:[#allocation2 + $0x108] sm:$0xff] %v2409
        %2460 = vst [vmem:[#allocation2 + $0x110] sm:$0xff] %v2410
        %2461 = vst [vmem:[#allocation2 + $0x118] sm:$0xff] %v2411
        %2462 = vst [vmem:[#allocation2 + $0x120] sm:$0xff] %v2412
        %2463 = vst [vmem:[#allocation2 + $0x128] sm:$0xff] %v2413
        %2464 = vst [vmem:[#allocation2 + $0x130] sm:$0xff] %v2414
        %2465 = vst [vmem:[#allocation2 + $0x138] sm:$0xff] %v2415
        %2466 = vst [vmem:[#allocation2 + $0x140] sm:$0xff] %v2416
        %2467 = vst [vmem:[#allocation2 + $0x148] sm:$0xff] %v2417
        %2468 = vst [vmem:[#allocation2 + $0x150] sm:$0xff] %v2418
        %2469 = vst [vmem:[#allocation2 + $0x158] sm:$0xff] %v2419
        %2470 = vst [vmem:[#allocation2 + $0x160] sm:$0xff] %v2420
        %2471 = vst [vmem:[#allocation2 + $0x168] sm:$0xff] %v2421
        %2472 = vst [vmem:[#allocation2 + $0x170] sm:$0xff] %v2422
        %2473 = vst [vmem:[#allocation2 + $0x178] sm:$0xff] %v2423
        %2474 = vst [vmem:[#allocation2 + $0x180] sm:$0xff] %v2424
        %2475 = vst [vmem:[#allocation2 + $0x188] sm:$0xff] %v2425
        %p2476 = scmp.eq.s32.totalorder %s21, 1
        // Predicated region
        $region68: #{mlp_pallas.1} parent=58 // pred_check
          %p2477 = pneg %p2476
        $region69: #{mlp_pallas.1} parent=58 // pred_check_branch
          %2479 = sbr.rel (%p2477) target = $region71
        $region70: #{mlp_pallas.1} parent=58 // pred_region
          %v2480 = vld [vmem:[#allocation2] sm:$0xff]
          %v2481 = vld [vmem:[#allocation2 + $0x8] sm:$0xff]
          %v2482 = vld [vmem:[#allocation2 + $0x10] sm:$0xff]
          %v2483 = vld [vmem:[#allocation2 + $0x18] sm:$0xff]
          %v2484 = vld [vmem:[#allocation2 + $0x20] sm:$0xff]
          %v2485 = vld [vmem:[#allocation2 + $0x28] sm:$0xff]
          %v2486 = vld [vmem:[#allocation2 + $0x30] sm:$0xff]
          %v2487 = vld [vmem:[#allocation2 + $0x38] sm:$0xff]
          %v2488 = vld [vmem:[#allocation2 + $0x40] sm:$0xff]
          %v2489 = vld [vmem:[#allocation2 + $0x48] sm:$0xff]
          %v2490 = vld [vmem:[#allocation2 + $0x50] sm:$0xff]
          %v2491 = vld [vmem:[#allocation2 + $0x58] sm:$0xff]
          %v2492 = vld [vmem:[#allocation2 + $0x60] sm:$0xff]
          %v2493 = vld [vmem:[#allocation2 + $0x68] sm:$0xff]
          %v2494 = vld [vmem:[#allocation2 + $0x70] sm:$0xff]
          %v2495 = vld [vmem:[#allocation2 + $0x78] sm:$0xff]
          %v2496 = vld [vmem:[#allocation2 + $0x80] sm:$0xff]
          %v2497 = vld [vmem:[#allocation2 + $0x88] sm:$0xff]
          %v2498 = vld [vmem:[#allocation2 + $0x90] sm:$0xff]
          %v2499 = vld [vmem:[#allocation2 + $0x98] sm:$0xff]
          %v2500 = vld [vmem:[#allocation2 + $0xa0] sm:$0xff]
          %v2501 = vld [vmem:[#allocation2 + $0xa8] sm:$0xff]
          %v2502 = vld [vmem:[#allocation2 + $0xb0] sm:$0xff]
          %v2503 = vld [vmem:[#allocation2 + $0xb8] sm:$0xff]
          %v2504 = vld [vmem:[#allocation2 + $0xc0] sm:$0xff]
          %v2505 = vld [vmem:[#allocation2 + $0xc8] sm:$0xff]
          %v2506 = vld [vmem:[#allocation2 + $0xd0] sm:$0xff]
          %v2507 = vld [vmem:[#allocation2 + $0xd8] sm:$0xff]
          %v2508 = vld [vmem:[#allocation2 + $0xe0] sm:$0xff]
          %v2509 = vld [vmem:[#allocation2 + $0xe8] sm:$0xff]
          %v2510 = vld [vmem:[#allocation2 + $0xf0] sm:$0xff]
          %v2511 = vld [vmem:[#allocation2 + $0xf8] sm:$0xff]
          %v2512 = vld [vmem:[#allocation2 + $0x100] sm:$0xff]
          %v2513 = vld [vmem:[#allocation2 + $0x108] sm:$0xff]
          %v2514 = vld [vmem:[#allocation2 + $0x110] sm:$0xff]
          %v2515 = vld [vmem:[#allocation2 + $0x118] sm:$0xff]
          %v2516 = vld [vmem:[#allocation2 + $0x120] sm:$0xff]
          %v2517 = vld [vmem:[#allocation2 + $0x128] sm:$0xff]
          %v2518 = vld [vmem:[#allocation2 + $0x130] sm:$0xff]
          %v2519 = vld [vmem:[#allocation2 + $0x138] sm:$0xff]
          %v2520 = vld [vmem:[#allocation2 + $0x140] sm:$0xff]
          %v2521 = vld [vmem:[#allocation2 + $0x148] sm:$0xff]
          %v2522 = vld [vmem:[#allocation2 + $0x150] sm:$0xff]
          %v2523 = vld [vmem:[#allocation2 + $0x158] sm:$0xff]
          %v2524 = vld [vmem:[#allocation2 + $0x160] sm:$0xff]
          %v2525 = vld [vmem:[#allocation2 + $0x168] sm:$0xff]
          %v2526 = vld [vmem:[#allocation2 + $0x170] sm:$0xff]
          %v2527 = vld [vmem:[#allocation2 + $0x178] sm:$0xff]
          %v2528 = vld [vmem:[#allocation2 + $0x180] sm:$0xff]
          %v2529 = vld [vmem:[#allocation2 + $0x188] sm:$0xff]
          %v2530 = vld [vmem:[%s4] sm:$0x3]
          %v2532 = vlaneseq
          %v2533 = vshrl.u32 %v2532, 7
          %v2534 = vsub.s32 0, %v2533
          %v2535 = vrot.slane %v2530, %v2534
          %v2536 = vlaneseq
          %v2537 = vshrl.u32 %v2536, 7
          %v2538 = vsub.s32 1, %v2537
          %v2539 = vrot.slane %v2530, %v2538
          %v2542 = vadd.f32 %v2480, %v2535
          %v2543 = vadd.f32 %v2481, %v2539
          %v2544 = vadd.f32 %v2482, %v2535
          %v2545 = vadd.f32 %v2483, %v2539
          %v2546 = vadd.f32 %v2484, %v2535
          %v2547 = vadd.f32 %v2485, %v2539
          %v2548 = vadd.f32 %v2486, %v2535
          %v2549 = vadd.f32 %v2487, %v2539
          %v2550 = vadd.f32 %v2488, %v2535
          %v2551 = vadd.f32 %v2489, %v2539
          %v2552 = vadd.f32 %v2490, %v2535
          %v2553 = vadd.f32 %v2491, %v2539
          %v2554 = vadd.f32 %v2492, %v2535
          %v2555 = vadd.f32 %v2493, %v2539
          %v2556 = vadd.f32 %v2494, %v2535
          %v2557 = vadd.f32 %v2495, %v2539
          %v2558 = vadd.f32 %v2496, %v2535
          %v2559 = vadd.f32 %v2497, %v2539
          %v2560 = vadd.f32 %v2498, %v2535
          %v2561 = vadd.f32 %v2499, %v2539
          %v2562 = vadd.f32 %v2500, %v2535
          %v2563 = vadd.f32 %v2501, %v2539
          %v2564 = vadd.f32 %v2502, %v2535
          %v2565 = vadd.f32 %v2503, %v2539
          %v2566 = vadd.f32 %v2504, %v2535
          %v2567 = vadd.f32 %v2505, %v2539
          %v2568 = vadd.f32 %v2506, %v2535
          %v2569 = vadd.f32 %v2507, %v2539
          %v2570 = vadd.f32 %v2508, %v2535
          %v2571 = vadd.f32 %v2509, %v2539
          %v2572 = vadd.f32 %v2510, %v2535
          %v2573 = vadd.f32 %v2511, %v2539
          %v2574 = vadd.f32 %v2512, %v2535
          %v2575 = vadd.f32 %v2513, %v2539
          %v2576 = vadd.f32 %v2514, %v2535
          %v2577 = vadd.f32 %v2515, %v2539
          %v2578 = vadd.f32 %v2516, %v2535
          %v2579 = vadd.f32 %v2517, %v2539
          %v2580 = vadd.f32 %v2518, %v2535
          %v2581 = vadd.f32 %v2519, %v2539
          %v2582 = vadd.f32 %v2520, %v2535
          %v2583 = vadd.f32 %v2521, %v2539
          %v2584 = vadd.f32 %v2522, %v2535
          %v2585 = vadd.f32 %v2523, %v2539
          %v2586 = vadd.f32 %v2524, %v2535
          %v2587 = vadd.f32 %v2525, %v2539
          %v2588 = vadd.f32 %v2526, %v2535
          %v2589 = vadd.f32 %v2527, %v2539
          %v2590 = vadd.f32 %v2528, %v2535
          %v2591 = vadd.f32 %v2529, %v2539
          %2592 = vst [vmem:[%s582] sm:$0xff] %v2542
          %2593 = vst [vmem:[%s582 + $0x8] sm:$0xff] %v2543
          %2594 = vst [vmem:[%s582 + $0x10] sm:$0xff] %v2544
          %2595 = vst [vmem:[%s582 + $0x18] sm:$0xff] %v2545
          %2596 = vst [vmem:[%s582 + $0x20] sm:$0xff] %v2546
          %2597 = vst [vmem:[%s582 + $0x28] sm:$0xff] %v2547
          %2598 = vst [vmem:[%s582 + $0x30] sm:$0xff] %v2548
          %2599 = vst [vmem:[%s582 + $0x38] sm:$0xff] %v2549
          %2600 = vst [vmem:[%s582 + $0x40] sm:$0xff] %v2550
          %2601 = vst [vmem:[%s582 + $0x48] sm:$0xff] %v2551
          %2602 = vst [vmem:[%s582 + $0x50] sm:$0xff] %v2552
          %2603 = vst [vmem:[%s582 + $0x58] sm:$0xff] %v2553
          %2604 = vst [vmem:[%s582 + $0x60] sm:$0xff] %v2554
          %2605 = vst [vmem:[%s582 + $0x68] sm:$0xff] %v2555
          %2606 = vst [vmem:[%s582 + $0x70] sm:$0xff] %v2556
          %2607 = vst [vmem:[%s582 + $0x78] sm:$0xff] %v2557
          %2608 = vst [vmem:[%s582 + $0x80] sm:$0xff] %v2558
          %2609 = vst [vmem:[%s582 + $0x88] sm:$0xff] %v2559
          %2610 = vst [vmem:[%s582 + $0x90] sm:$0xff] %v2560
          %2611 = vst [vmem:[%s582 + $0x98] sm:$0xff] %v2561
          %2612 = vst [vmem:[%s582 + $0xa0] sm:$0xff] %v2562
          %2613 = vst [vmem:[%s582 + $0xa8] sm:$0xff] %v2563
          %2614 = vst [vmem:[%s582 + $0xb0] sm:$0xff] %v2564
          %2615 = vst [vmem:[%s582 + $0xb8] sm:$0xff] %v2565
          %2616 = vst [vmem:[%s582 + $0xc0] sm:$0xff] %v2566
          %2617 = vst [vmem:[%s582 + $0xc8] sm:$0xff] %v2567
          %2618 = vst [vmem:[%s582 + $0xd0] sm:$0xff] %v2568
          %2619 = vst [vmem:[%s582 + $0xd8] sm:$0xff] %v2569
          %2620 = vst [vmem:[%s582 + $0xe0] sm:$0xff] %v2570
          %2621 = vst [vmem:[%s582 + $0xe8] sm:$0xff] %v2571
          %2622 = vst [vmem:[%s582 + $0xf0] sm:$0xff] %v2572
          %2623 = vst [vmem:[%s582 + $0xf8] sm:$0xff] %v2573
          %2624 = vst [vmem:[%s582 + $0x100] sm:$0xff] %v2574
          %2625 = vst [vmem:[%s582 + $0x108] sm:$0xff] %v2575
          %2626 = vst [vmem:[%s582 + $0x110] sm:$0xff] %v2576
          %2627 = vst [vmem:[%s582 + $0x118] sm:$0xff] %v2577
          %2628 = vst [vmem:[%s582 + $0x120] sm:$0xff] %v2578
          %2629 = vst [vmem:[%s582 + $0x128] sm:$0xff] %v2579
          %2630 = vst [vmem:[%s582 + $0x130] sm:$0xff] %v2580
          %2631 = vst [vmem:[%s582 + $0x138] sm:$0xff] %v2581
          %2632 = vst [vmem:[%s582 + $0x140] sm:$0xff] %v2582
          %2633 = vst [vmem:[%s582 + $0x148] sm:$0xff] %v2583
          %2634 = vst [vmem:[%s582 + $0x150] sm:$0xff] %v2584
          %2635 = vst [vmem:[%s582 + $0x158] sm:$0xff] %v2585
          %2636 = vst [vmem:[%s582 + $0x160] sm:$0xff] %v2586
          %2637 = vst [vmem:[%s582 + $0x168] sm:$0xff] %v2587
          %2638 = vst [vmem:[%s582 + $0x170] sm:$0xff] %v2588
          %2639 = vst [vmem:[%s582 + $0x178] sm:$0xff] %v2589
          %2640 = vst [vmem:[%s582 + $0x180] sm:$0xff] %v2590
          %2641 = vst [vmem:[%s582 + $0x188] sm:$0xff] %v2591
        $region71: #{mlp_pallas.1} parent=58 // pred_fallthru
          _
        %s2642 = smul.u32 25, %s20
        %p2643 = scmp.lt.s32.totalorder %s2642, 49
        %s2644 = scalar_select %p2643, %s2642, 49
        %s2645 = smul.addr %s2644, 2
        %s2646 = smul.addr %s2645, 8
        %s2647 = scalar_lea.vmem %s5, %s2646
        // Predicated region
        $region72: #{mlp_pallas.1} parent=58 // pred_check
          %p2648 = pneg %p171
        $region73: #{mlp_pallas.1} parent=58 // pred_check_branch
          %2650 = sbr.rel (%p2648) target = $region75
        $region74: #{mlp_pallas.1} parent=58 // pred_region
          %s2651 = smul.u32 25, %s20
        $region75: #{mlp_pallas.1} parent=58 // pred_fallthru
          _
      $region59: #{mlp_pallas.1} parent=5 // pred_fallthru
        _
      %p2652 = scmp.le.s32.totalorder 2, %s11
      // Predicated region
      $region76: #{mlp_pallas.1} parent=5 // pred_check
        %p2653 = pneg %p2652
      $region77: #{mlp_pallas.1} parent=5 // pred_check_branch
        %2655 = sbr.rel (%p2653) target = $region79
      $region78: #{mlp_pallas.1} parent=5 // pred_region
        %s2656 = ssub.s32 %s11, 2
        // Predicated region
        $region80: #{mlp_pallas.1} parent=78 // pred_check
          %p2657 = pneg %p177
        $region81: #{mlp_pallas.1} parent=78 // pred_check_branch
          %2659 = sbr.rel (%p2657) target = $region83
        $region82: #{mlp_pallas.1} parent=78 // pred_region
          %s2660 = smul.u32 25, %s22
          %p2661 = scmp.lt.s32.totalorder %s2660, 49
          %s2662 = scalar_select %p2661, %s2660, 49
          %s2663 = smul.addr %s2662, 2
          %s2664 = smul.addr %s2663, 8
          %s2665 = scalar_lea.vmem %s5, %s2664
        $region83: #{mlp_pallas.1} parent=78 // pred_fallthru
          _
      $region79: #{mlp_pallas.1} parent=5 // pred_fallthru
        _
    $region6: #{mlp_pallas.1} parent=1 // loop_footer
      %s15 = sadd.s32 1, %s11
    $region7: #{mlp_pallas.1} parent=1 // loop_footer_branch
      %10 = sbr.rel target = $region3
    $region8: #{mlp_pallas.1} parent=1 // loop_exit
      _

</llo_original>
